<compile_context>
chip_gen: v7x
topology: tpu7x:2x2x1
jax: 0.10.0
libtpu: 0.0.40
codegen_flags: <defaults>
</compile_context>

<pallas_src>
import jax
import jax.numpy as jnp
from jax.experimental import pallas as pl
from jax.experimental.pallas import tpu as pltpu


def _sigmoid(x):
    return 1.0 / (1.0 + jnp.exp(-x))


def _htne_kernel(src_ref, tar_ref, h_ref, n_ref, delta_ref, dtime_ref,
                 mask_ref, out_ref):
    src = src_ref[...]          # (D, TB)
    tar = tar_ref[...]          # (D, TB)
    h = h_ref[...]              # (H, D, TB)
    n = n_ref[...]              # (N, D, TB)
    delta = delta_ref[...]      # (1, TB)
    d_time = dtime_ref[...]     # (H, TB)
    mask = mask_ref[...]        # (H, TB)

    # att = softmax_H(-||src - h||^2)
    diff_sh = src[None, :, :] - h                          # (H, D, TB)
    att_logits = -jnp.sum(diff_sh * diff_sh, axis=1)       # (H, TB)
    att_max = jnp.max(att_logits, axis=0, keepdims=True)   # (1, TB)
    att_exp = jnp.exp(att_logits - att_max)                # (H, TB)
    denom = jnp.sum(att_exp, axis=0, keepdims=True)        # (1, TB)
    att = att_exp / denom                                  # (H, TB)

    # p_mu = -||src - tar||^2
    diff_st = src - tar
    p_mu = -jnp.sum(diff_st * diff_st, axis=0, keepdims=True)   # (1, TB)

    # p_alpha = -||h - tar||^2
    diff_ht = h - tar[None, :, :]
    p_alpha = -jnp.sum(diff_ht * diff_ht, axis=1)          # (H, TB)

    # Hawkes time-decay weights (sign follows the reference code:
    # exp(+delta * d_time), not exp(-delta * d_time)).
    w = att * jnp.exp(delta * d_time) * mask               # (H, TB)

    p_lambda = p_mu + jnp.sum(w * p_alpha, axis=0, keepdims=True)  # (1, TB)

    # n_mu = -||src - n||^2
    diff_sn = src[None, :, :] - n
    n_mu = -jnp.sum(diff_sn * diff_sn, axis=1)              # (N, TB)

    # Distributed weighted sum over history (no (H, N) intermediate, no MXU):
    #   sum_h w_h * n_alpha[h, j]
    #     = -(sum_h w_h ||h_h||^2) - (sum_h w_h) ||n_j||^2 + 2 <sum_h w_h h_h, n_j>
    hn2 = jnp.sum(h * h, axis=1)                            # (H, TB)
    nn2 = jnp.sum(n * n, axis=1)                            # (N, TB)
    w_sum = jnp.sum(w, axis=0, keepdims=True)               # (1, TB)
    whn2 = jnp.sum(w * hn2, axis=0, keepdims=True)          # (1, TB)
    wh = jnp.sum(w[:, None, :] * h, axis=0)                 # (D, TB)
    wh_dot_n = jnp.sum(wh[None, :, :] * n, axis=1)          # (N, TB)
    n_lambda = n_mu - whn2 - w_sum * nn2 + 2.0 * wh_dot_n   # (N, TB)

    # HTNE loss
    pos_loss = -jnp.log(_sigmoid(p_lambda) + 1e-6)          # (1, TB)
    neg_loss = jnp.sum(jnp.log(_sigmoid(-n_lambda) + 1e-6),
                       axis=0, keepdims=True)               # (1, TB)
    out_ref[...] = pos_loss - neg_loss                      # (1, TB)


def _round_up(x, m):
    return ((x + m - 1) // m) * m


def htne_forward_pallas(node_emb, delta_emb, s_nodes, t_nodes, t_times,
                        h_nodes, h_times, h_time_mask, n_nodes, *, tb=512):
    """Glue: embedding gathers + batch-on-lanes re-layout + pallas_call."""
    B = s_nodes.shape[0]
    H = h_nodes.shape[1]
    N = n_nodes.shape[1]
    D = node_emb.shape[1]

    # Embedding gathers (XLA side).
    src_emb = node_emb[s_nodes[:, 0]]                  # (B, D)
    tar_emb = node_emb[t_nodes[:, 0]]                  # (B, D)
    h_emb = node_emb[h_nodes]                          # (B, H, D)
    n_emb = node_emb[n_nodes]                          # (B, N, D)
    delta = delta_emb[s_nodes[:, 0]]                   # (B, 1)
    d_time = jnp.abs(t_times - h_times)                # (B, H)
    mask = h_time_mask.astype(jnp.float32)             # (B, H)

    # Batch tile: multiple of 128 (lane axis), capped at padded batch size.
    tb = _round_up(max(1, tb), 128)
    tb = min(tb, _round_up(B, 128))
    Bp = _round_up(B, tb)
    pad = Bp - B

    def pad_b(x):
        if pad == 0:
            return x
        cfg = [(0, pad)] + [(0, 0)] * (x.ndim - 1)
        return jnp.pad(x, cfg)

    # Batch-on-lanes layout (batch is the trailing / lane axis everywhere).
    src_t = pad_b(src_emb).T                           # (D, Bp)
    tar_t = pad_b(tar_emb).T                           # (D, Bp)
    h_t = jnp.transpose(pad_b(h_emb), (1, 2, 0))       # (H, D, Bp)
    n_t = jnp.transpose(pad_b(n_emb), (1, 2, 0))       # (N, D, Bp)
    delta_t = pad_b(delta).T                           # (1, Bp)
    dtime_t = pad_b(d_time).T                          # (H, Bp)
    mask_t = pad_b(mask).T                             # (H, Bp)

    grid = (Bp // tb,)
    out = pl.pallas_call(
        _htne_kernel,
        out_shape=jax.ShapeDtypeStruct((1, Bp), jnp.float32),
        grid_spec=pltpu.PrefetchScalarGridSpec(
            num_scalar_prefetch=0,
            grid=grid,
            in_specs=[
                pl.BlockSpec((D, tb), lambda i: (0, i)),        # src
                pl.BlockSpec((D, tb), lambda i: (0, i)),        # tar
                pl.BlockSpec((H, D, tb), lambda i: (0, 0, i)),  # h
                pl.BlockSpec((N, D, tb), lambda i: (0, 0, i)),  # n
                pl.BlockSpec((1, tb), lambda i: (0, i)),        # delta
                pl.BlockSpec((H, tb), lambda i: (0, i)),        # d_time
                pl.BlockSpec((H, tb), lambda i: (0, i)),        # mask
            ],
            out_specs=pl.BlockSpec((1, tb), lambda i: (0, i)),
        ),
        compiler_params=pltpu.CompilerParams(
            dimension_semantics=("parallel",)),
    )(src_t, tar_t, h_t, n_t, delta_t, dtime_t, mask_t)
    return out[0, :B]                                   # (B,)


def htne_forward_reference(node_emb, delta_emb, s_nodes, t_nodes, t_times,
                           h_nodes, h_times, h_time_mask, n_nodes):
    """Pure-JAX reference mirroring the PyTorch forward exactly.

    s_nodes, t_nodes: (B, 1); t_times: (B, 1); h_*: (B, H); n_nodes: (B, N).
    """
    src_emb = node_emb[s_nodes]                         # (B, 1, D)
    tar_emb = node_emb[t_nodes]                         # (B, 1, D)
    n_emb = node_emb[n_nodes]                           # (B, N, D)
    h_emb = node_emb[h_nodes]                           # (B, H, D)
    att = jax.nn.softmax(-jnp.sum((src_emb - h_emb) ** 2, axis=2), axis=1)
    p_mu = -jnp.sum((src_emb - tar_emb) ** 2, axis=2)[:, 0]
    p_alpha = -jnp.sum((h_emb - tar_emb) ** 2, axis=2)
    delta = delta_emb[s_nodes][:, :, 0]                 # (B, 1)
    d_time = jnp.abs(t_times - h_times)                 # (B, H)
    p_lambda = p_mu + jnp.sum(
        att * p_alpha * jnp.exp(delta * d_time) * h_time_mask, axis=1)
    n_mu = -jnp.sum((src_emb - n_emb) ** 2, axis=2)
    n_alpha = -jnp.sum(
        (h_emb[:, :, None, :] - n_emb[:, None, :, :]) ** 2, axis=3)
    n_lambda = n_mu + jnp.sum(
        att[:, :, None] * n_alpha
        * jnp.exp(delta * d_time)[:, :, None]
        * h_time_mask[:, :, None], axis=1)
    pos_loss = -jnp.log(jax.nn.sigmoid(p_lambda) + 1e-6)
    neg_loss = jnp.sum(jnp.log(jax.nn.sigmoid(-n_lambda) + 1e-6), axis=1)
    return pos_loss - neg_loss


if __name__ == "__main__":
    # Small, deterministic config (B chosen so the grid has multiple tiles and
    # the padding path is exercised).
    node_dim = 100    # number of nodes in embedding table
    emb_size = 32     # D
    B = 300           # batch
    H = 8             # history length
    N = 5             # negative samples

    key = jax.random.PRNGKey(0)
    k_emb, k_s, k_t, k_tt, k_h, k_ht, k_m, k_n = jax.random.split(key, 8)

    # Parameters (same init as the PyTorch module)
    node_emb = jax.random.uniform(
        k_emb, (node_dim, emb_size), dtype=jnp.float32,
        minval=-1.0 / emb_size, maxval=1.0 / emb_size)
    delta_emb = jnp.ones((node_dim, 1), dtype=jnp.float32)

    # Inputs
    s_nodes = jax.random.randint(k_s, (B, 1), 0, node_dim)
    t_nodes = jax.random.randint(k_t, (B, 1), 0, node_dim)
    t_times = jax.random.uniform(k_tt, (B, 1), dtype=jnp.float32)
    h_nodes = jax.random.randint(k_h, (B, H), 0, node_dim)
    h_times = jax.random.uniform(k_ht, (B, H), dtype=jnp.float32)
    h_time_mask = (jax.random.uniform(k_m, (B, H)) > 0.3).astype(jnp.float32)
    n_nodes = jax.random.randint(k_n, (B, N), 0, node_dim)

    loss = htne_forward_pallas(node_emb, delta_emb, s_nodes, t_nodes, t_times,
                               h_nodes, h_times, h_time_mask, n_nodes, tb=128)
    loss = jax.block_until_ready(loss)

    # NOTE: pass s_nodes/t_nodes as (B, 1) (matches the PyTorch module), so the
    # reference keeps the singleton dim that the broadcasts rely on.
    ref = htne_forward_reference(node_emb, delta_emb, s_nodes, t_nodes,
                                 t_times, h_nodes, h_times, h_time_mask,
                                 n_nodes)
    assert loss.shape == (B,)
    assert jnp.allclose(loss, ref, atol=1e-4, rtol=1e-4), (loss, ref)
    print("KERNEL_OK")
</pallas_src>

<mosaic_0001>
module attributes {stable_mosaic.version = 11 : i64} {
  func.func @_htne_kernel(%arg0: i32, %arg1: memref<32x128xf32, #tpu.memory_space<vmem>>, %arg2: memref<32x128xf32, #tpu.memory_space<vmem>>, %arg3: memref<8x32x128xf32, #tpu.memory_space<vmem>>, %arg4: memref<5x32x128xf32, #tpu.memory_space<vmem>>, %arg5: memref<1x128xf32, #tpu.memory_space<vmem>>, %arg6: memref<8x128xf32, #tpu.memory_space<vmem>>, %arg7: memref<8x128xf32, #tpu.memory_space<vmem>>, %arg8: memref<1x128xf32, #tpu.memory_space<vmem>>) attributes {dimension_semantics = [#tpu.dimension_semantics<parallel>], iteration_bounds = array<i64: 3>, scalar_prefetch = 0 : i64, scratch_operands = 0 : i64, tpu.core_type = #tpu.core_type<tc>, window_params = [{transform_indices = @transform_0, window_bounds = array<i64: 32, 128>}, {transform_indices = @transform_1, window_bounds = array<i64: 32, 128>}, {transform_indices = @transform_2, window_bounds = array<i64: 8, 32, 128>}, {transform_indices = @transform_3, window_bounds = array<i64: 5, 32, 128>}, {transform_indices = @transform_4, window_bounds = array<i64: 1, 128>}, {transform_indices = @transform_5, window_bounds = array<i64: 8, 128>}, {transform_indices = @transform_6, window_bounds = array<i64: 8, 128>}, {transform_indices = @transform_7, window_bounds = array<i64: 1, 128>}]} {
    %c0 = arith.constant 0 : index
    %c0_0 = arith.constant 0 : index
    %0 = vector.load %arg1[%c0, %c0_0] : memref<32x128xf32, #tpu.memory_space<vmem>>, vector<32x128xf32>
    %c0_1 = arith.constant 0 : index
    %c0_2 = arith.constant 0 : index
    %1 = vector.load %arg2[%c0_1, %c0_2] : memref<32x128xf32, #tpu.memory_space<vmem>>, vector<32x128xf32>
    %c0_3 = arith.constant 0 : index
    %c0_4 = arith.constant 0 : index
    %c0_5 = arith.constant 0 : index
    %2 = vector.load %arg3[%c0_3, %c0_4, %c0_5] : memref<8x32x128xf32, #tpu.memory_space<vmem>>, vector<8x32x128xf32>
    %c0_6 = arith.constant 0 : index
    %c0_7 = arith.constant 0 : index
    %c0_8 = arith.constant 0 : index
    %3 = vector.load %arg4[%c0_6, %c0_7, %c0_8] : memref<5x32x128xf32, #tpu.memory_space<vmem>>, vector<5x32x128xf32>
    %c0_9 = arith.constant 0 : index
    %c0_10 = arith.constant 0 : index
    %4 = vector.load %arg5[%c0_9, %c0_10] : memref<1x128xf32, #tpu.memory_space<vmem>>, vector<1x128xf32>
    %c0_11 = arith.constant 0 : index
    %c0_12 = arith.constant 0 : index
    %5 = vector.load %arg6[%c0_11, %c0_12] : memref<8x128xf32, #tpu.memory_space<vmem>>, vector<8x128xf32>
    %c0_13 = arith.constant 0 : index
    %c0_14 = arith.constant 0 : index
    %6 = vector.load %arg7[%c0_13, %c0_14] : memref<8x128xf32, #tpu.memory_space<vmem>>, vector<8x128xf32>
    %7 = vector.shape_cast %0 : vector<32x128xf32> to vector<1x32x128xf32>
    %8 = vector.broadcast %7 : vector<1x32x128xf32> to vector<8x32x128xf32>
    %9 = arith.subf %8, %2 : vector<8x32x128xf32>
    %10 = arith.mulf %9, %9 : vector<8x32x128xf32>
    %cst = arith.constant dense<0.000000e+00> : vector<8x128xf32>
    %11 = vector.multi_reduction <add>, %10, %cst [1] : vector<8x32x128xf32> to vector<8x128xf32>
    %cst_15 = arith.constant 0.000000e+00 : f32
    %12 = vector.broadcast %cst_15 : f32 to vector<8x128xf32>
    %13 = arith.subf %12, %11 : vector<8x128xf32>
    %cst_16 = arith.constant dense<0xFF800000> : vector<128xf32>
    %14 = vector.multi_reduction <maximumf>, %13, %cst_16 [0] : vector<8x128xf32> to vector<128xf32>
    %15 = vector.shape_cast %14 : vector<128xf32> to vector<1x128xf32>
    %16 = vector.broadcast %15 : vector<1x128xf32> to vector<8x128xf32>
    %17 = arith.subf %13, %16 : vector<8x128xf32>
    %18 = math.exp %17 : vector<8x128xf32>
    %cst_17 = arith.constant dense<0.000000e+00> : vector<128xf32>
    %19 = vector.multi_reduction <add>, %18, %cst_17 [0] : vector<8x128xf32> to vector<128xf32>
    %20 = vector.shape_cast %19 : vector<128xf32> to vector<1x128xf32>
    %21 = vector.broadcast %20 : vector<1x128xf32> to vector<8x128xf32>
    %22 = arith.divf %18, %21 : vector<8x128xf32>
    %23 = arith.subf %0, %1 : vector<32x128xf32>
    %24 = arith.mulf %23, %23 : vector<32x128xf32>
    %cst_18 = arith.constant dense<0.000000e+00> : vector<128xf32>
    %25 = vector.multi_reduction <add>, %24, %cst_18 [0] : vector<32x128xf32> to vector<128xf32>
    %26 = vector.shape_cast %25 : vector<128xf32> to vector<1x128xf32>
    %cst_19 = arith.constant 0.000000e+00 : f32
    %27 = vector.broadcast %cst_19 : f32 to vector<1x128xf32>
    %28 = arith.subf %27, %26 : vector<1x128xf32>
    %29 = vector.shape_cast %1 : vector<32x128xf32> to vector<1x32x128xf32>
    %30 = vector.broadcast %29 : vector<1x32x128xf32> to vector<8x32x128xf32>
    %31 = arith.subf %2, %30 : vector<8x32x128xf32>
    %32 = arith.mulf %31, %31 : vector<8x32x128xf32>
    %cst_20 = arith.constant dense<0.000000e+00> : vector<8x128xf32>
    %33 = vector.multi_reduction <add>, %32, %cst_20 [1] : vector<8x32x128xf32> to vector<8x128xf32>
    %cst_21 = arith.constant 0.000000e+00 : f32
    %34 = vector.broadcast %cst_21 : f32 to vector<8x128xf32>
    %35 = arith.subf %34, %33 : vector<8x128xf32>
    %36 = vector.broadcast %4 : vector<1x128xf32> to vector<8x128xf32>
    %37 = arith.mulf %36, %5 : vector<8x128xf32>
    %38 = math.exp %37 : vector<8x128xf32>
    %39 = arith.mulf %22, %38 : vector<8x128xf32>
    %40 = arith.mulf %39, %6 : vector<8x128xf32>
    %41 = arith.mulf %40, %35 : vector<8x128xf32>
    %cst_22 = arith.constant dense<0.000000e+00> : vector<128xf32>
    %42 = vector.multi_reduction <add>, %41, %cst_22 [0] : vector<8x128xf32> to vector<128xf32>
    %43 = vector.shape_cast %42 : vector<128xf32> to vector<1x128xf32>
    %44 = arith.addf %28, %43 : vector<1x128xf32>
    %45 = vector.shape_cast %0 : vector<32x128xf32> to vector<1x32x128xf32>
    %46 = vector.broadcast %45 : vector<1x32x128xf32> to vector<5x32x128xf32>
    %47 = arith.subf %46, %3 : vector<5x32x128xf32>
    %48 = arith.mulf %47, %47 : vector<5x32x128xf32>
    %cst_23 = arith.constant dense<0.000000e+00> : vector<5x128xf32>
    %49 = vector.multi_reduction <add>, %48, %cst_23 [1] : vector<5x32x128xf32> to vector<5x128xf32>
    %cst_24 = arith.constant 0.000000e+00 : f32
    %50 = vector.broadcast %cst_24 : f32 to vector<5x128xf32>
    %51 = arith.subf %50, %49 : vector<5x128xf32>
    %52 = arith.mulf %2, %2 : vector<8x32x128xf32>
    %cst_25 = arith.constant dense<0.000000e+00> : vector<8x128xf32>
    %53 = vector.multi_reduction <add>, %52, %cst_25 [1] : vector<8x32x128xf32> to vector<8x128xf32>
    %54 = arith.mulf %3, %3 : vector<5x32x128xf32>
    %cst_26 = arith.constant dense<0.000000e+00> : vector<5x128xf32>
    %55 = vector.multi_reduction <add>, %54, %cst_26 [1] : vector<5x32x128xf32> to vector<5x128xf32>
    %cst_27 = arith.constant dense<0.000000e+00> : vector<128xf32>
    %56 = vector.multi_reduction <add>, %40, %cst_27 [0] : vector<8x128xf32> to vector<128xf32>
    %57 = vector.shape_cast %56 : vector<128xf32> to vector<1x128xf32>
    %58 = arith.mulf %40, %53 : vector<8x128xf32>
    %cst_28 = arith.constant dense<0.000000e+00> : vector<128xf32>
    %59 = vector.multi_reduction <add>, %58, %cst_28 [0] : vector<8x128xf32> to vector<128xf32>
    %60 = vector.shape_cast %59 : vector<128xf32> to vector<1x128xf32>
    %61 = vector.shape_cast %40 : vector<8x128xf32> to vector<8x1x128xf32>
    %62 = vector.broadcast %61 : vector<8x1x128xf32> to vector<8x32x128xf32>
    %63 = arith.mulf %62, %2 : vector<8x32x128xf32>
    %cst_29 = arith.constant dense<0.000000e+00> : vector<32x128xf32>
    %64 = vector.multi_reduction <add>, %63, %cst_29 [0] : vector<8x32x128xf32> to vector<32x128xf32>
    %65 = vector.shape_cast %64 : vector<32x128xf32> to vector<1x32x128xf32>
    %66 = vector.broadcast %65 : vector<1x32x128xf32> to vector<5x32x128xf32>
    %67 = arith.mulf %66, %3 : vector<5x32x128xf32>
    %cst_30 = arith.constant dense<0.000000e+00> : vector<5x128xf32>
    %68 = vector.multi_reduction <add>, %67, %cst_30 [1] : vector<5x32x128xf32> to vector<5x128xf32>
    %69 = vector.broadcast %60 : vector<1x128xf32> to vector<5x128xf32>
    %70 = arith.subf %51, %69 : vector<5x128xf32>
    %71 = vector.broadcast %57 : vector<1x128xf32> to vector<5x128xf32>
    %72 = arith.mulf %71, %55 : vector<5x128xf32>
    %73 = arith.subf %70, %72 : vector<5x128xf32>
    %cst_31 = arith.constant 2.000000e+00 : f32
    %74 = vector.broadcast %cst_31 : f32 to vector<5x128xf32>
    %75 = arith.mulf %74, %68 : vector<5x128xf32>
    %76 = arith.addf %73, %75 : vector<5x128xf32>
    %cst_32 = arith.constant 0.000000e+00 : f32
    %77 = vector.broadcast %cst_32 : f32 to vector<1x128xf32>
    %78 = arith.subf %77, %44 : vector<1x128xf32>
    %79 = math.exp %78 : vector<1x128xf32>
    %cst_33 = arith.constant 1.000000e+00 : f32
    %80 = vector.broadcast %cst_33 : f32 to vector<1x128xf32>
    %81 = arith.addf %80, %79 : vector<1x128xf32>
    %cst_34 = arith.constant 1.000000e+00 : f32
    %82 = vector.broadcast %cst_34 : f32 to vector<1x128xf32>
    %83 = arith.divf %82, %81 : vector<1x128xf32>
    %cst_35 = arith.constant 9.99999997E-7 : f32
    %84 = vector.broadcast %cst_35 : f32 to vector<1x128xf32>
    %85 = arith.addf %83, %84 : vector<1x128xf32>
    %86 = math.log %85 : vector<1x128xf32>
    %cst_36 = arith.constant 0.000000e+00 : f32
    %87 = vector.broadcast %cst_36 : f32 to vector<1x128xf32>
    %88 = arith.subf %87, %86 : vector<1x128xf32>
    %cst_37 = arith.constant 0.000000e+00 : f32
    %89 = vector.broadcast %cst_37 : f32 to vector<5x128xf32>
    %90 = arith.subf %89, %76 : vector<5x128xf32>
    %cst_38 = arith.constant 0.000000e+00 : f32
    %91 = vector.broadcast %cst_38 : f32 to vector<5x128xf32>
    %92 = arith.subf %91, %90 : vector<5x128xf32>
    %93 = math.exp %92 : vector<5x128xf32>
    %cst_39 = arith.constant 1.000000e+00 : f32
    %94 = vector.broadcast %cst_39 : f32 to vector<5x128xf32>
    %95 = arith.addf %94, %93 : vector<5x128xf32>
    %cst_40 = arith.constant 1.000000e+00 : f32
    %96 = vector.broadcast %cst_40 : f32 to vector<5x128xf32>
    %97 = arith.divf %96, %95 : vector<5x128xf32>
    %cst_41 = arith.constant 9.99999997E-7 : f32
    %98 = vector.broadcast %cst_41 : f32 to vector<5x128xf32>
    %99 = arith.addf %97, %98 : vector<5x128xf32>
    %100 = math.log %99 : vector<5x128xf32>
    %cst_42 = arith.constant dense<0.000000e+00> : vector<128xf32>
    %101 = vector.multi_reduction <add>, %100, %cst_42 [0] : vector<5x128xf32> to vector<128xf32>
    %102 = vector.shape_cast %101 : vector<128xf32> to vector<1x128xf32>
    %103 = arith.subf %88, %102 : vector<1x128xf32>
    %c0_43 = arith.constant 0 : index
    %c0_44 = arith.constant 0 : index
    %104 = vector.load %arg8[%c0_43, %c0_44] : memref<1x128xf32, #tpu.memory_space<vmem>>, vector<1x128xf32>
    tpu.vector_store %arg8[%c0_43, %c0_44], %103 {strides = array<i32>} : memref<1x128xf32, #tpu.memory_space<vmem>>, vector<1x128xf32>,
    return
  }
  func.func @transform_0(%arg0: i32) -> (i32, i32) {
    %c0_i32 = arith.constant 0 : i32
    %c0_i32_0 = arith.constant 0 : i32
    return %c0_i32, %arg0 : i32, i32
  }
  func.func @transform_1(%arg0: i32) -> (i32, i32) {
    %c0_i32 = arith.constant 0 : i32
    %c0_i32_0 = arith.constant 0 : i32
    return %c0_i32, %arg0 : i32, i32
  }
  func.func @transform_2(%arg0: i32) -> (i32, i32, i32) {
    %c0_i32 = arith.constant 0 : i32
    %c0_i32_0 = arith.constant 0 : i32
    %c0_i32_1 = arith.constant 0 : i32
    return %c0_i32, %c0_i32_0, %arg0 : i32, i32, i32
  }
  func.func @transform_3(%arg0: i32) -> (i32, i32, i32) {
    %c0_i32 = arith.constant 0 : i32
    %c0_i32_0 = arith.constant 0 : i32
    %c0_i32_1 = arith.constant 0 : i32
    return %c0_i32, %c0_i32_0, %arg0 : i32, i32, i32
  }
  func.func @transform_4(%arg0: i32) -> (i32, i32) {
    %c0_i32 = arith.constant 0 : i32
    %c0_i32_0 = arith.constant 0 : i32
    return %c0_i32, %arg0 : i32, i32
  }
  func.func @transform_5(%arg0: i32) -> (i32, i32) {
    %c0_i32 = arith.constant 0 : i32
    %c0_i32_0 = arith.constant 0 : i32
    return %c0_i32, %arg0 : i32, i32
  }
  func.func @transform_6(%arg0: i32) -> (i32, i32) {
    %c0_i32 = arith.constant 0 : i32
    %c0_i32_0 = arith.constant 0 : i32
    return %c0_i32, %arg0 : i32, i32
  }
  func.func @transform_7(%arg0: i32) -> (i32, i32) {
    %c0_i32 = arith.constant 0 : i32
    %c0_i32_0 = arith.constant 0 : i32
    return %c0_i32, %arg0 : i32, i32
  }
}

</mosaic_0001>

<llo_original>
// kernel: tpu_custom_call.1
$region0: #{tpu_custom_call.1}
  #allocation0 [shape = 'u32[]', space=smem, size = 0x4, offset = 0x4, fixed_abs, tag = 'smem constant byte address 0x4 - core index']
  #allocation1 [shape = 'u32[144,128]{1,0:T(1,128)}', space=vmem, size = 0x12000, scoped, tag = 'internal scratch']
  %s0 = inlined_call_operand.hbm [shape: f32[32,384], index: 0, kind: input, shape index: {}]
  %s1 = inlined_call_operand.hbm [shape: f32[32,384], index: 1, kind: input, shape index: {}]
  %s2 = inlined_call_operand.hbm [shape: f32[8,32,384], index: 2, kind: input, shape index: {}]
  %s3 = inlined_call_operand.hbm [shape: f32[5,32,384], index: 3, kind: input, shape index: {}]
  %s4 = inlined_call_operand.vmem [shape: f32[1,384], index: 4, kind: input, shape index: {}]
  %s5 = inlined_call_operand.hbm [shape: f32[8,384], index: 5, kind: input, shape index: {}]
  %s6 = inlined_call_operand.hbm [shape: f32[8,384], index: 6, kind: input, shape index: {}]
  %s7 = inlined_call_operand.hbm [shape: f32[1,384], index: 7, kind: output, shape index: {}]
  %s8 = sld [smem:[#allocation0]]
  $region85: #{tpu_custom_call.1} parent=0
    _
  %s10 = ssub.s32 1, %s8
  %s11 = scalar_select 0, %s10, %s8
  $region1: #{tpu_custom_call.1} parent=0
    #allocation2 [shape = 'u8[32768]{0}', space=vmem, size = 0x8000, scoped, tag = 'input window, operand 0']
    #allocation3 [shape = 's32[2]{0}', space=sflag, size = 0x8, scoped, tag = 'scoped memory for tpu_custom_call.1']
    #allocation4 [shape = 's32[2]{0}', space=sflag, size = 0x8, scoped, tag = 'scoped memory for tpu_custom_call.1']
    #allocation5 [shape = 'u8[32768]{0}', space=vmem, size = 0x8000, scoped, tag = 'input window, operand 1']
    #allocation6 [shape = 's32[2]{0}', space=sflag, size = 0x8, scoped, tag = 'scoped memory for tpu_custom_call.1']
    #allocation7 [shape = 'u8[262144]{0}', space=vmem, size = 0x40000, scoped, tag = 'input window, operand 2']
    #allocation8 [shape = 'u8[163840]{0}', space=vmem, size = 0x28000, scoped, tag = 'input window, operand 3']
    #allocation9 [shape = 's32[2]{0}', space=sflag, size = 0x8, scoped, tag = 'scoped memory for tpu_custom_call.1']
    #allocation10 [shape = 'u8[8192]{0}', space=vmem, size = 0x2000, scoped, tag = 'input window, operand 5']
    #allocation11 [shape = 'u8[8192]{0}', space=vmem, size = 0x2000, scoped, tag = 'input window, operand 6']
    #allocation12 [shape = 's32[2]{0}', space=sflag, size = 0x8, scoped, tag = 'scoped memory for tpu_custom_call.1']
    #allocation13 [shape = 'u8[1024]{0}', space=vmem, size = 0x400, scoped, tag = 'output window, operand 0']
    %12 = vsyncpa [#allocation3], 0
    %s13 = scalar_lea.sflag [#allocation3], 1
    %14 = vsyncpa %s13, 0
    %15 = vsyncpa [#allocation6], 0
    %s16 = scalar_lea.sflag [#allocation6], 1
    %17 = vsyncpa %s16, 0
    %18 = vsyncpa [#allocation9], 0
    %s19 = scalar_lea.sflag [#allocation9], 1
    %20 = vsyncpa %s19, 0
    %21 = vsyncpa [#allocation12], 0
    %s22 = scalar_lea.sflag [#allocation12], 1
    %23 = vsyncpa %s22, 0
    %24 = vsyncpa [#allocation4], 0
    %s25 = scalar_lea.sflag [#allocation4], 1
    %26 = vsyncpa %s25, 0
    loop: start=0, step=1, limit=5
    $region2: #{tpu_custom_call.1} parent=1 // loop_pre_header
      _
    $region3: #{tpu_custom_call.1} parent=1 // loop_header
      %s28 = sphi 0, %s32
      %p29 = scmp.ge.s32.totalorder %s28, 5
      %s38 = sphi 0, %s40
      %s41 = sphi 0, %s38
      %s42 = sphi 0, %s41
      %s58 = sphi 0, %s42
      %s64 = sphi 0, %s66
      %s67 = sphi 0, %s64
      %s68 = sphi 0, %s67
      %s84 = sphi 0, %s68
      %s90 = sphi 0, %s92
      %s93 = sphi 0, %s90
      %s94 = sphi 0, %s93
      %s110 = sphi 0, %s94
      %s116 = sphi 0, %s118
      %s119 = sphi 0, %s116
      %s120 = sphi 0, %s119
      %s136 = sphi 0, %s120
      %s142 = sphi 0, %s144
      %s145 = sphi 0, %s142
      %s146 = sphi 0, %s145
      %s162 = sphi 0, %s146
      %s168 = sphi 0, %s170
      %s171 = sphi 0, %s168
      %s172 = sphi 0, %s171
      %s188 = sphi 0, %s172
      %s194 = sphi 0, %s196
      %s197 = sphi 0, %s194
      %s198 = sphi 0, %s197
      %s214 = sphi 0, %s198
      %s220 = sphi 0, %s222
      %s223 = sphi 0, %s220
      %s224 = sphi 0, %s223
      %s240 = sphi 0, %s224
    $region4: #{tpu_custom_call.1} parent=1 // loop_header_branch
      %31 = sbr.rel (%p29) target = $region8
    $region5: #{tpu_custom_call.1} parent=1 // loop_body
      %s33 = ssub.s32 %s28, 1
      %s34 = ssub.s32 %s28, 2
      %s35 = sadd.s32 %s28, 1
      %s36 = ssub.s32 %s28, %s35
      %p37 = scmp.eq.s32.totalorder %s36, 0
      %s39 = sadd.s32 %s38, 1
      %s40 = scalar_select %p37, %s38, %s39
      %p43 = pneg %p37
      %p44 = scmp.eq.s32.totalorder %s28, 2
      %p45 = por %p43, %p44
      %p46 = scmp.ne.s32.totalorder %s38, %s41
      %p47 = scmp.eq.s32.totalorder %s28, 0
      %p48 = por %p46, %p47
      %p49 = scmp.ne.s32.totalorder %s38, %s41
      %p50 = scmp.eq.s32.totalorder %s33, 2
      %p51 = por %p49, %p50
      %p52 = scmp.ne.s32.totalorder %s41, %s42
      %p53 = scmp.eq.s32.totalorder %s33, 0
      %p54 = por %p52, %p53
      %p55 = scmp.ne.s32.totalorder %s41, %s42
      %p56 = scmp.eq.s32.totalorder %s34, 2
      %p57 = por %p55, %p56
      %p59 = scmp.ne.s32.totalorder %s42, %s58
      %p60 = scmp.eq.s32.totalorder %s34, 0
      %p61 = por %p59, %p60
      %s62 = ssub.s32 %s28, %s35
      %p63 = scmp.eq.s32.totalorder %s62, 0
      %s65 = sadd.s32 %s64, 1
      %s66 = scalar_select %p63, %s64, %s65
      %p69 = pneg %p63
      %p70 = scmp.eq.s32.totalorder %s28, 2
      %p71 = por %p69, %p70
      %p72 = scmp.ne.s32.totalorder %s64, %s67
      %p73 = scmp.eq.s32.totalorder %s28, 0
      %p74 = por %p72, %p73
      %p75 = scmp.ne.s32.totalorder %s64, %s67
      %p76 = scmp.eq.s32.totalorder %s33, 2
      %p77 = por %p75, %p76
      %p78 = scmp.ne.s32.totalorder %s67, %s68
      %p79 = scmp.eq.s32.totalorder %s33, 0
      %p80 = por %p78, %p79
      %p81 = scmp.ne.s32.totalorder %s67, %s68
      %p82 = scmp.eq.s32.totalorder %s34, 2
      %p83 = por %p81, %p82
      %p85 = scmp.ne.s32.totalorder %s68, %s84
      %p86 = scmp.eq.s32.totalorder %s34, 0
      %p87 = por %p85, %p86
      %s88 = ssub.s32 %s28, %s35
      %p89 = scmp.eq.s32.totalorder %s88, 0
      %s91 = sadd.s32 %s90, 1
      %s92 = scalar_select %p89, %s90, %s91
      %p95 = pneg %p89
      %p96 = scmp.eq.s32.totalorder %s28, 2
      %p97 = por %p95, %p96
      %p98 = scmp.ne.s32.totalorder %s90, %s93
      %p99 = scmp.eq.s32.totalorder %s28, 0
      %p100 = por %p98, %p99
      %p101 = scmp.ne.s32.totalorder %s90, %s93
      %p102 = scmp.eq.s32.totalorder %s33, 2
      %p103 = por %p101, %p102
      %p104 = scmp.ne.s32.totalorder %s93, %s94
      %p105 = scmp.eq.s32.totalorder %s33, 0
      %p106 = por %p104, %p105
      %p107 = scmp.ne.s32.totalorder %s93, %s94
      %p108 = scmp.eq.s32.totalorder %s34, 2
      %p109 = por %p107, %p108
      %p111 = scmp.ne.s32.totalorder %s94, %s110
      %p112 = scmp.eq.s32.totalorder %s34, 0
      %p113 = por %p111, %p112
      %s114 = ssub.s32 %s28, %s35
      %p115 = scmp.eq.s32.totalorder %s114, 0
      %s117 = sadd.s32 %s116, 1
      %s118 = scalar_select %p115, %s116, %s117
      %p121 = pneg %p115
      %p122 = scmp.eq.s32.totalorder %s28, 2
      %p123 = por %p121, %p122
      %p124 = scmp.ne.s32.totalorder %s116, %s119
      %p125 = scmp.eq.s32.totalorder %s28, 0
      %p126 = por %p124, %p125
      %p127 = scmp.ne.s32.totalorder %s116, %s119
      %p128 = scmp.eq.s32.totalorder %s33, 2
      %p129 = por %p127, %p128
      %p130 = scmp.ne.s32.totalorder %s119, %s120
      %p131 = scmp.eq.s32.totalorder %s33, 0
      %p132 = por %p130, %p131
      %p133 = scmp.ne.s32.totalorder %s119, %s120
      %p134 = scmp.eq.s32.totalorder %s34, 2
      %p135 = por %p133, %p134
      %p137 = scmp.ne.s32.totalorder %s120, %s136
      %p138 = scmp.eq.s32.totalorder %s34, 0
      %p139 = por %p137, %p138
      %s140 = ssub.s32 %s28, %s35
      %p141 = scmp.eq.s32.totalorder %s140, 0
      %s143 = sadd.s32 %s142, 1
      %s144 = scalar_select %p141, %s142, %s143
      %p147 = pneg %p141
      %p148 = scmp.eq.s32.totalorder %s28, 2
      %p149 = por %p147, %p148
      %p150 = scmp.ne.s32.totalorder %s142, %s145
      %p151 = scmp.eq.s32.totalorder %s28, 0
      %p152 = por %p150, %p151
      %p153 = scmp.ne.s32.totalorder %s142, %s145
      %p154 = scmp.eq.s32.totalorder %s33, 2
      %p155 = por %p153, %p154
      %p156 = scmp.ne.s32.totalorder %s145, %s146
      %p157 = scmp.eq.s32.totalorder %s33, 0
      %p158 = por %p156, %p157
      %p159 = scmp.ne.s32.totalorder %s145, %s146
      %p160 = scmp.eq.s32.totalorder %s34, 2
      %p161 = por %p159, %p160
      %p163 = scmp.ne.s32.totalorder %s146, %s162
      %p164 = scmp.eq.s32.totalorder %s34, 0
      %p165 = por %p163, %p164
      %s166 = ssub.s32 %s28, %s35
      %p167 = scmp.eq.s32.totalorder %s166, 0
      %s169 = sadd.s32 %s168, 1
      %s170 = scalar_select %p167, %s168, %s169
      %p173 = pneg %p167
      %p174 = scmp.eq.s32.totalorder %s28, 2
      %p175 = por %p173, %p174
      %p176 = scmp.ne.s32.totalorder %s168, %s171
      %p177 = scmp.eq.s32.totalorder %s28, 0
      %p178 = por %p176, %p177
      %p179 = scmp.ne.s32.totalorder %s168, %s171
      %p180 = scmp.eq.s32.totalorder %s33, 2
      %p181 = por %p179, %p180
      %p182 = scmp.ne.s32.totalorder %s171, %s172
      %p183 = scmp.eq.s32.totalorder %s33, 0
      %p184 = por %p182, %p183
      %p185 = scmp.ne.s32.totalorder %s171, %s172
      %p186 = scmp.eq.s32.totalorder %s34, 2
      %p187 = por %p185, %p186
      %p189 = scmp.ne.s32.totalorder %s172, %s188
      %p190 = scmp.eq.s32.totalorder %s34, 0
      %p191 = por %p189, %p190
      %s192 = ssub.s32 %s28, %s35
      %p193 = scmp.eq.s32.totalorder %s192, 0
      %s195 = sadd.s32 %s194, 1
      %s196 = scalar_select %p193, %s194, %s195
      %p199 = pneg %p193
      %p200 = scmp.eq.s32.totalorder %s28, 2
      %p201 = por %p199, %p200
      %p202 = scmp.ne.s32.totalorder %s194, %s197
      %p203 = scmp.eq.s32.totalorder %s28, 0
      %p204 = por %p202, %p203
      %p205 = scmp.ne.s32.totalorder %s194, %s197
      %p206 = scmp.eq.s32.totalorder %s33, 2
      %p207 = por %p205, %p206
      %p208 = scmp.ne.s32.totalorder %s197, %s198
      %p209 = scmp.eq.s32.totalorder %s33, 0
      %p210 = por %p208, %p209
      %p211 = scmp.ne.s32.totalorder %s197, %s198
      %p212 = scmp.eq.s32.totalorder %s34, 2
      %p213 = por %p211, %p212
      %p215 = scmp.ne.s32.totalorder %s198, %s214
      %p216 = scmp.eq.s32.totalorder %s34, 0
      %p217 = por %p215, %p216
      %s218 = ssub.s32 %s28, %s35
      %p219 = scmp.eq.s32.totalorder %s218, 0
      %s221 = sadd.s32 %s220, 1
      %s222 = scalar_select %p219, %s220, %s221
      %p225 = pneg %p219
      %p226 = scmp.eq.s32.totalorder %s28, 2
      %p227 = por %p225, %p226
      %p228 = scmp.ne.s32.totalorder %s220, %s223
      %p229 = scmp.eq.s32.totalorder %s28, 0
      %p230 = por %p228, %p229
      %p231 = scmp.ne.s32.totalorder %s220, %s223
      %p232 = scmp.eq.s32.totalorder %s33, 2
      %p233 = por %p231, %p232
      %p234 = scmp.ne.s32.totalorder %s223, %s224
      %p235 = scmp.eq.s32.totalorder %s33, 0
      %p236 = por %p234, %p235
      %p237 = scmp.ne.s32.totalorder %s223, %s224
      %p238 = scmp.eq.s32.totalorder %s34, 2
      %p239 = por %p237, %p238
      %p241 = scmp.ne.s32.totalorder %s224, %s240
      %p242 = scmp.eq.s32.totalorder %s34, 0
      %p243 = por %p241, %p242
      %p244 = scmp.le.s32.totalorder 1, %s28
      %p245 = scmp.lt.s32.totalorder %s28, 4
      %p246 = pnand %p244, %p245
      %p247 = pneg %p246
      // Predicated region
      $region9: #{tpu_custom_call.1} parent=5 // pred_check
        _
      $region10: #{tpu_custom_call.1} parent=5 // pred_check_branch
        %249 = sbr.rel (%p246) target = $region12
      $region11: #{tpu_custom_call.1} parent=5 // pred_region
        %s250 = ssub.s32 %s28, 1
      $region12: #{tpu_custom_call.1} parent=5 // pred_fallthru
        _
      %p251 = scmp.lt.s32.totalorder %s28, 3
      // Predicated region
      $region13: #{tpu_custom_call.1} parent=5 // pred_check
        %p252 = pneg %p251
      $region14: #{tpu_custom_call.1} parent=5 // pred_check_branch
        %254 = sbr.rel (%p252) target = $region16
      $region15: #{tpu_custom_call.1} parent=5 // pred_region
        // Predicated region
        $region17: #{tpu_custom_call.1} parent=15 // pred_check
          %p255 = pneg %p48
        $region18: #{tpu_custom_call.1} parent=15 // pred_check_branch
          %257 = sbr.rel (%p255) target = $region20
        $region19: #{tpu_custom_call.1} parent=15 // pred_region
          %s258 = sand.u32 %s38, 1
          %s259 = scalar_lea.sflag [#allocation3], %s258
          %s260 = sand.u32 %s38, 1
          %s261 = smul.addr %s260, 32
          %s262 = scalar_lea.vmem [#allocation2], %s261
          %s264 = ssub.s32 512, 512
          %265 = vsyncadd %s259, %s264
          %s266 = smul.addr %s28, 128
          %s267 = scalar_lea.hbm %s0, %s266
          %s268 = sshll.u32 %s262, 4
          %s269 = int_to_ptr.vmem [resolvable:$true] %s268
          %274 = dma.hbm_to_vmem [thread:$0]  %s267, 512, %s269, %s259, 384, 128, 8
        $region20: #{tpu_custom_call.1} parent=15 // pred_fallthru
          _
        // Predicated region
        $region21: #{tpu_custom_call.1} parent=15 // pred_check
          %p275 = pneg %p74
        $region22: #{tpu_custom_call.1} parent=15 // pred_check_branch
          %277 = sbr.rel (%p275) target = $region24
        $region23: #{tpu_custom_call.1} parent=15 // pred_region
          %s278 = sand.u32 %s28, 1
          %s279 = scalar_lea.sflag [#allocation6], %s278
          %s280 = sand.u32 %s64, 1
          %s281 = smul.addr %s280, 32
          %s282 = scalar_lea.vmem [#allocation5], %s281
          %s284 = ssub.s32 512, 512
          %285 = vsyncadd %s279, %s284
          %s286 = smul.addr %s28, 128
          %s287 = scalar_lea.hbm %s1, %s286
          %s288 = sshll.u32 %s282, 4
          %s289 = int_to_ptr.vmem [resolvable:$true] %s288
          %294 = dma.hbm_to_vmem [thread:$0]  %s287, 512, %s289, %s279, 384, 128, 8
        $region24: #{tpu_custom_call.1} parent=15 // pred_fallthru
          _
        // Predicated region
        $region25: #{tpu_custom_call.1} parent=15 // pred_check
          %p295 = pneg %p100
        $region26: #{tpu_custom_call.1} parent=15 // pred_check_branch
          %297 = sbr.rel (%p295) target = $region28
        $region27: #{tpu_custom_call.1} parent=15 // pred_region
          %s298 = sand.u32 %s28, 1
          %s299 = scalar_lea.sflag [#allocation6], %s298
          %s300 = sand.u32 %s90, 1
          %s301 = smul.addr %s300, 256
          %s302 = scalar_lea.vmem [#allocation7], %s301
          %s304 = ssub.s32 4096, 4096
          %305 = vsyncadd %s299, %s304
          %s306 = smul.addr %s28, 128
          %s307 = scalar_lea.hbm %s2, %s306
          %s308 = sshll.u32 %s302, 4
          %s309 = int_to_ptr.vmem [resolvable:$true] %s308
          %314 = dma.hbm_to_vmem [thread:$0]  %s307, 4096, %s309, %s299, 384, 128, 8
        $region28: #{tpu_custom_call.1} parent=15 // pred_fallthru
          _
        // Predicated region
        $region29: #{tpu_custom_call.1} parent=15 // pred_check
          %p315 = pneg %p126
        $region30: #{tpu_custom_call.1} parent=15 // pred_check_branch
          %317 = sbr.rel (%p315) target = $region32
        $region31: #{tpu_custom_call.1} parent=15 // pred_region
          %s318 = sand.u32 %s28, 1
          %s319 = scalar_lea.sflag [#allocation9], %s318
          %s320 = sand.u32 %s116, 1
          %s321 = smul.addr %s320, 160
          %s322 = scalar_lea.vmem [#allocation8], %s321
          %s324 = ssub.s32 2560, 2560
          %325 = vsyncadd %s319, %s324
          %s326 = smul.addr %s28, 128
          %s327 = scalar_lea.hbm %s3, %s326
          %s328 = sshll.u32 %s322, 4
          %s329 = int_to_ptr.vmem [resolvable:$true] %s328
          %334 = dma.hbm_to_vmem [thread:$0]  %s327, 2560, %s329, %s319, 384, 128, 8
        $region32: #{tpu_custom_call.1} parent=15 // pred_fallthru
          _
        // Predicated region
        $region33: #{tpu_custom_call.1} parent=15 // pred_check
          %p335 = pneg %p152
        $region34: #{tpu_custom_call.1} parent=15 // pred_check_branch
          %337 = sbr.rel (%p335) target = $region36
        $region35: #{tpu_custom_call.1} parent=15 // pred_region
          %p338 = scmp.lt.s32.totalorder %s28, 2
          %s339 = scalar_select %p338, %s28, 2
          %s340 = scalar_lea.vmem %s4, %s339
        $region36: #{tpu_custom_call.1} parent=15 // pred_fallthru
          _
        // Predicated region
        $region37: #{tpu_custom_call.1} parent=15 // pred_check
          %p341 = pneg %p178
        $region38: #{tpu_custom_call.1} parent=15 // pred_check_branch
          %343 = sbr.rel (%p341) target = $region40
        $region39: #{tpu_custom_call.1} parent=15 // pred_region
          %s344 = sand.u32 %s28, 1
          %s345 = scalar_lea.sflag [#allocation9], %s344
          %s346 = sand.u32 %s168, 1
          %s347 = smul.addr %s346, 8
          %s348 = scalar_lea.vmem [#allocation10], %s347
          %s350 = ssub.s32 128, 128
          %351 = vsyncadd %s345, %s350
          %s352 = smul.addr %s28, 128
          %s353 = scalar_lea.hbm %s5, %s352
          %s355 = sshll.u32 %s348, 4
          %s356 = int_to_ptr.vmem [resolvable:$true] %s355
          %358 = dma.hbm_to_vmem [thread:$0]  %s353, 128, %s356, %s345
        $region40: #{tpu_custom_call.1} parent=15 // pred_fallthru
          _
        // Predicated region
        $region41: #{tpu_custom_call.1} parent=15 // pred_check
          %p359 = pneg %p204
        $region42: #{tpu_custom_call.1} parent=15 // pred_check_branch
          %361 = sbr.rel (%p359) target = $region44
        $region43: #{tpu_custom_call.1} parent=15 // pred_region
          %s362 = sand.u32 %s194, 1
          %s363 = scalar_lea.sflag [#allocation12], %s362
          %s364 = sand.u32 %s194, 1
          %s365 = smul.addr %s364, 8
          %s366 = scalar_lea.vmem [#allocation11], %s365
          %s368 = ssub.s32 128, 128
          %369 = vsyncadd %s363, %s368
          %s370 = smul.addr %s28, 128
          %s371 = scalar_lea.hbm %s6, %s370
          %s373 = sshll.u32 %s366, 4
          %s374 = int_to_ptr.vmem [resolvable:$true] %s373
          %376 = dma.hbm_to_vmem [thread:$0]  %s371, 128, %s374, %s363
        $region44: #{tpu_custom_call.1} parent=15 // pred_fallthru
          _
      $region16: #{tpu_custom_call.1} parent=5 // pred_fallthru
        _
      %p377 = scmp.le.s32.totalorder 1, %s28
      %p378 = scmp.lt.s32.totalorder %s28, 4
      %p379 = pnand %p377, %p378
      %p380 = pneg %p379
      // Predicated region
      $region45: #{tpu_custom_call.1} parent=5 // pred_check
        _
      $region46: #{tpu_custom_call.1} parent=5 // pred_check_branch
        %382 = sbr.rel (%p379) target = $region48
      $region47: #{tpu_custom_call.1} parent=5 // pred_region
        %s383 = ssub.s32 %s28, 1
        %s384 = sand.u32 %s41, 1
        %s385 = scalar_lea.sflag [#allocation3], %s384
        %s386 = sand.u32 %s41, 1
        %s387 = smul.addr %s386, 32
        %s388 = scalar_lea.vmem [#allocation2], %s387
        // Predicated region
        $region49: #{tpu_custom_call.1} parent=47 // pred_check
          %p389 = pneg %p54
        $region50: #{tpu_custom_call.1} parent=47 // pred_check_branch
          %391 = sbr.rel (%p389) target = $region52
        $region51: #{tpu_custom_call.1} parent=47 // pred_region
          %392 = dma.done %s385, 512
        $region52: #{tpu_custom_call.1} parent=47 // pred_fallthru
          _
        %s393 = sand.u32 %s33, 1
        %s394 = scalar_lea.sflag [#allocation6], %s393
        %s395 = sand.u32 %s67, 1
        %s396 = smul.addr %s395, 32
        %s397 = scalar_lea.vmem [#allocation5], %s396
        // Predicated region
        $region53: #{tpu_custom_call.1} parent=47 // pred_check
          %p398 = pneg %p80
        $region54: #{tpu_custom_call.1} parent=47 // pred_check_branch
          %400 = sbr.rel (%p398) target = $region56
        $region55: #{tpu_custom_call.1} parent=47 // pred_region
          %401 = dma.done %s394, 512
        $region56: #{tpu_custom_call.1} parent=47 // pred_fallthru
          _
        %s402 = sand.u32 %s33, 1
        %s403 = scalar_lea.sflag [#allocation6], %s402
        %s404 = sand.u32 %s93, 1
        %s405 = smul.addr %s404, 256
        %s406 = scalar_lea.vmem [#allocation7], %s405
        // Predicated region
        $region57: #{tpu_custom_call.1} parent=47 // pred_check
          %p407 = pneg %p106
        $region58: #{tpu_custom_call.1} parent=47 // pred_check_branch
          %409 = sbr.rel (%p407) target = $region60
        $region59: #{tpu_custom_call.1} parent=47 // pred_region
          %410 = dma.done %s403, 4096
        $region60: #{tpu_custom_call.1} parent=47 // pred_fallthru
          _
        %s411 = sand.u32 %s33, 1
        %s412 = scalar_lea.sflag [#allocation9], %s411
        %s413 = sand.u32 %s119, 1
        %s414 = smul.addr %s413, 160
        %s415 = scalar_lea.vmem [#allocation8], %s414
        // Predicated region
        $region61: #{tpu_custom_call.1} parent=47 // pred_check
          %p416 = pneg %p132
        $region62: #{tpu_custom_call.1} parent=47 // pred_check_branch
          %418 = sbr.rel (%p416) target = $region64
        $region63: #{tpu_custom_call.1} parent=47 // pred_region
          %419 = dma.done %s412, 2560
        $region64: #{tpu_custom_call.1} parent=47 // pred_fallthru
          _
        %s420 = sand.u32 %s33, 1
        %s421 = scalar_lea.sflag [#allocation9], %s420
        %s422 = sand.u32 %s171, 1
        %s423 = smul.addr %s422, 8
        %s424 = scalar_lea.vmem [#allocation10], %s423
        // Predicated region
        $region65: #{tpu_custom_call.1} parent=47 // pred_check
          %p425 = pneg %p184
        $region66: #{tpu_custom_call.1} parent=47 // pred_check_branch
          %427 = sbr.rel (%p425) target = $region68
        $region67: #{tpu_custom_call.1} parent=47 // pred_region
          %428 = dma.done %s421, 128
        $region68: #{tpu_custom_call.1} parent=47 // pred_fallthru
          _
        %s429 = sand.u32 %s197, 1
        %s430 = scalar_lea.sflag [#allocation12], %s429
        %s431 = sand.u32 %s197, 1
        %s432 = smul.addr %s431, 8
        %s433 = scalar_lea.vmem [#allocation11], %s432
        // Predicated region
        $region69: #{tpu_custom_call.1} parent=47 // pred_check
          %p434 = pneg %p210
        $region70: #{tpu_custom_call.1} parent=47 // pred_check_branch
          %436 = sbr.rel (%p434) target = $region72
        $region71: #{tpu_custom_call.1} parent=47 // pred_region
          %437 = dma.done %s430, 128
        $region72: #{tpu_custom_call.1} parent=47 // pred_fallthru
          _
        %s438 = sand.u32 %s41, 1
        %s439 = scalar_lea.sflag [#allocation3], %s438
        %s440 = sand.u32 %s41, 1
        %s441 = smul.addr %s440, 32
        %s442 = scalar_lea.vmem [#allocation2], %s441
        %p443 = pneg %p54
        %p444 = pneg %p51
        %s445 = sand.u32 %s33, 1
        %s446 = scalar_lea.sflag [#allocation6], %s445
        %s447 = sand.u32 %s67, 1
        %s448 = smul.addr %s447, 32
        %s449 = scalar_lea.vmem [#allocation5], %s448
        %p450 = pneg %p80
        %p451 = pneg %p77
        %s452 = sand.u32 %s33, 1
        %s453 = scalar_lea.sflag [#allocation6], %s452
        %s454 = sand.u32 %s93, 1
        %s455 = smul.addr %s454, 256
        %s456 = scalar_lea.vmem [#allocation7], %s455
        %p457 = pneg %p106
        %p458 = pneg %p103
        %s459 = sand.u32 %s33, 1
        %s460 = scalar_lea.sflag [#allocation9], %s459
        %s461 = sand.u32 %s119, 1
        %s462 = smul.addr %s461, 160
        %s463 = scalar_lea.vmem [#allocation8], %s462
        %p464 = pneg %p132
        %p465 = pneg %p129
        %p466 = scmp.lt.s32.totalorder %s33, 2
        %s467 = scalar_select %p466, %s33, 2
        %s468 = scalar_lea.vmem %s4, %s467
        %p469 = pneg %p158
        %p470 = pneg %p155
        %s471 = sand.u32 %s33, 1
        %s472 = scalar_lea.sflag [#allocation9], %s471
        %s473 = sand.u32 %s171, 1
        %s474 = smul.addr %s473, 8
        %s475 = scalar_lea.vmem [#allocation10], %s474
        %p476 = pneg %p184
        %p477 = pneg %p181
        %s478 = sand.u32 %s197, 1
        %s479 = scalar_lea.sflag [#allocation12], %s478
        %s480 = sand.u32 %s197, 1
        %s481 = smul.addr %s480, 8
        %s482 = scalar_lea.vmem [#allocation11], %s481
        %p483 = pneg %p210
        %p484 = pneg %p207
        %p485 = pneg %p236
        %p486 = pneg %p233
        %s487 = sand.u32 %s223, 1
        %s488 = scalar_lea.sflag [#allocation4], %s487
        %s489 = sand.u32 %s223, 1
        %s490 = scalar_lea.vmem [#allocation13], %s489
        %p491 = scmp.lt.s32.totalorder %s33, 2
        %s492 = scalar_select %p491, %s33, 2
        %s493 = scalar_lea.vmem %s4, %s492
        %v494 = vld [vmem:[%s388] sm:$0xff]
        %v495 = vld [vmem:[%s388 + $0x8] sm:$0xff]
        %v496 = vld [vmem:[%s388 + $0x10] sm:$0xff]
        %v497 = vld [vmem:[%s388 + $0x18] sm:$0xff]
        %v498 = vld [vmem:[%s397] sm:$0xff]
        %v499 = vld [vmem:[%s397 + $0x8] sm:$0xff]
        %v500 = vld [vmem:[%s397 + $0x10] sm:$0xff]
        %v501 = vld [vmem:[%s397 + $0x18] sm:$0xff]
        %v502 = vld [vmem:[%s406] sm:$0xff]
        %v503 = vld [vmem:[%s406 + $0x8] sm:$0xff]
        %v504 = vld [vmem:[%s406 + $0x10] sm:$0xff]
        %v505 = vld [vmem:[%s406 + $0x18] sm:$0xff]
        %v506 = vld [vmem:[%s406 + $0x20] sm:$0xff]
        %v507 = vld [vmem:[%s406 + $0x28] sm:$0xff]
        %v508 = vld [vmem:[%s406 + $0x30] sm:$0xff]
        %v509 = vld [vmem:[%s406 + $0x38] sm:$0xff]
        %v510 = vld [vmem:[%s406 + $0x40] sm:$0xff]
        %v511 = vld [vmem:[%s406 + $0x48] sm:$0xff]
        %v512 = vld [vmem:[%s406 + $0x50] sm:$0xff]
        %v513 = vld [vmem:[%s406 + $0x58] sm:$0xff]
        %v514 = vld [vmem:[%s406 + $0x60] sm:$0xff]
        %v515 = vld [vmem:[%s406 + $0x68] sm:$0xff]
        %v516 = vld [vmem:[%s406 + $0x70] sm:$0xff]
        %v517 = vld [vmem:[%s406 + $0x78] sm:$0xff]
        %v518 = vld [vmem:[%s406 + $0x80] sm:$0xff]
        %v519 = vld [vmem:[%s406 + $0x88] sm:$0xff]
        %v520 = vld [vmem:[%s406 + $0x90] sm:$0xff]
        %v521 = vld [vmem:[%s406 + $0x98] sm:$0xff]
        %v522 = vld [vmem:[%s406 + $0xa0] sm:$0xff]
        %v523 = vld [vmem:[%s406 + $0xa8] sm:$0xff]
        %v524 = vld [vmem:[%s406 + $0xb0] sm:$0xff]
        %v525 = vld [vmem:[%s406 + $0xb8] sm:$0xff]
        %v526 = vld [vmem:[%s406 + $0xc0] sm:$0xff]
        %v527 = vld [vmem:[%s406 + $0xc8] sm:$0xff]
        %v528 = vld [vmem:[%s406 + $0xd0] sm:$0xff]
        %v529 = vld [vmem:[%s406 + $0xd8] sm:$0xff]
        %v530 = vld [vmem:[%s406 + $0xe0] sm:$0xff]
        %v531 = vld [vmem:[%s406 + $0xe8] sm:$0xff]
        %v532 = vld [vmem:[%s406 + $0xf0] sm:$0xff]
        %v533 = vld [vmem:[%s406 + $0xf8] sm:$0xff]
        %v534 = vld [vmem:[%s415] sm:$0xff]
        %v535 = vld [vmem:[%s415 + $0x8] sm:$0xff]
        %v536 = vld [vmem:[%s415 + $0x10] sm:$0xff]
        %v537 = vld [vmem:[%s415 + $0x18] sm:$0xff]
        %v538 = vld [vmem:[%s415 + $0x20] sm:$0xff]
        %v539 = vld [vmem:[%s415 + $0x28] sm:$0xff]
        %v540 = vld [vmem:[%s415 + $0x30] sm:$0xff]
        %v541 = vld [vmem:[%s415 + $0x38] sm:$0xff]
        %v542 = vld [vmem:[%s415 + $0x40] sm:$0xff]
        %v543 = vld [vmem:[%s415 + $0x48] sm:$0xff]
        %v544 = vld [vmem:[%s415 + $0x50] sm:$0xff]
        %v545 = vld [vmem:[%s415 + $0x58] sm:$0xff]
        %v546 = vld [vmem:[%s415 + $0x60] sm:$0xff]
        %v547 = vld [vmem:[%s415 + $0x68] sm:$0xff]
        %v548 = vld [vmem:[%s415 + $0x70] sm:$0xff]
        %v549 = vld [vmem:[%s415 + $0x78] sm:$0xff]
        %v550 = vld [vmem:[%s415 + $0x80] sm:$0xff]
        %v551 = vld [vmem:[%s415 + $0x88] sm:$0xff]
        %v552 = vld [vmem:[%s415 + $0x90] sm:$0xff]
        %v553 = vld [vmem:[%s415 + $0x98] sm:$0xff]
        %v554 = vld [vmem:[%s493] sm:$0x1]
        %v555 = vld [vmem:[%s424] sm:$0xff]
        %v556 = vld [vmem:[%s433] sm:$0xff]
        %v557 = vsub.f32 %v494, %v502
        %v558 = vsub.f32 %v495, %v503
        %v559 = vsub.f32 %v496, %v504
        %v560 = vsub.f32 %v497, %v505
        %v561 = vsub.f32 %v494, %v506
        %v562 = vsub.f32 %v495, %v507
        %v563 = vsub.f32 %v496, %v508
        %v564 = vsub.f32 %v497, %v509
        %v565 = vsub.f32 %v494, %v510
        %v566 = vsub.f32 %v495, %v511
        %v567 = vsub.f32 %v496, %v512
        %v568 = vsub.f32 %v497, %v513
        %v569 = vsub.f32 %v494, %v514
        %v570 = vsub.f32 %v495, %v515
        %v571 = vsub.f32 %v496, %v516
        %v572 = vsub.f32 %v497, %v517
        %v573 = vsub.f32 %v494, %v518
        %v574 = vsub.f32 %v495, %v519
        %v575 = vsub.f32 %v496, %v520
        %v576 = vsub.f32 %v497, %v521
        %v577 = vsub.f32 %v494, %v522
        %v578 = vsub.f32 %v495, %v523
        %v579 = vsub.f32 %v496, %v524
        %v580 = vsub.f32 %v497, %v525
        %v581 = vsub.f32 %v494, %v526
        %v582 = vsub.f32 %v495, %v527
        %v583 = vsub.f32 %v496, %v528
        %v584 = vsub.f32 %v497, %v529
        %v585 = vsub.f32 %v494, %v530
        %v586 = vsub.f32 %v495, %v531
        %v587 = vsub.f32 %v496, %v532
        %v588 = vsub.f32 %v497, %v533
        %v589 = vmul.f32 %v557, %v557
        %v590 = vmul.f32 %v558, %v558
        %v591 = vmul.f32 %v559, %v559
        %v592 = vmul.f32 %v560, %v560
        %v593 = vmul.f32 %v561, %v561
        %v594 = vmul.f32 %v562, %v562
        %v595 = vmul.f32 %v563, %v563
        %v596 = vmul.f32 %v564, %v564
        %v597 = vmul.f32 %v565, %v565
        %v598 = vmul.f32 %v566, %v566
        %v599 = vmul.f32 %v567, %v567
        %v600 = vmul.f32 %v568, %v568
        %v601 = vmul.f32 %v569, %v569
        %v602 = vmul.f32 %v570, %v570
        %v603 = vmul.f32 %v571, %v571
        %v604 = vmul.f32 %v572, %v572
        %v605 = vmul.f32 %v573, %v573
        %v606 = vmul.f32 %v574, %v574
        %v607 = vmul.f32 %v575, %v575
        %v608 = vmul.f32 %v576, %v576
        %v609 = vmul.f32 %v577, %v577
        %v610 = vmul.f32 %v578, %v578
        %v611 = vmul.f32 %v579, %v579
        %v612 = vmul.f32 %v580, %v580
        %v613 = vmul.f32 %v581, %v581
        %v614 = vmul.f32 %v582, %v582
        %v615 = vmul.f32 %v583, %v583
        %v616 = vmul.f32 %v584, %v584
        %v617 = vmul.f32 %v585, %v585
        %v618 = vmul.f32 %v586, %v586
        %v619 = vmul.f32 %v587, %v587
        %v620 = vmul.f32 %v588, %v588
        %v621 = vadd.f32 %v589, %v590
        %v622 = vadd.f32 %v621, %v591
        %v623 = vadd.f32 %v622, %v592
        %v624 = vrot.slane %v623, 4
        %v625 = vadd.f32 %v623, %v624
        %v626 = vrot.slane %v625, 2
        %v627 = vadd.f32 %v625, %v626
        %v628 = vrot.slane %v627, 1
        %v629 = vadd.f32 %v627, %v628
        %v630 = vadd.f32 %v593, %v594
        %v631 = vadd.f32 %v630, %v595
        %v632 = vadd.f32 %v631, %v596
        %v633 = vrot.slane %v632, 4
        %v634 = vadd.f32 %v632, %v633
        %v635 = vrot.slane %v634, 2
        %v636 = vadd.f32 %v634, %v635
        %v637 = vrot.slane %v636, 1
        %v638 = vadd.f32 %v636, %v637
        %v639 = vadd.f32 %v597, %v598
        %v640 = vadd.f32 %v639, %v599
        %v641 = vadd.f32 %v640, %v600
        %v642 = vrot.slane %v641, 4
        %v643 = vadd.f32 %v641, %v642
        %v644 = vrot.slane %v643, 2
        %v645 = vadd.f32 %v643, %v644
        %v646 = vrot.slane %v645, 1
        %v647 = vadd.f32 %v645, %v646
        %v648 = vadd.f32 %v601, %v602
        %v649 = vadd.f32 %v648, %v603
        %v650 = vadd.f32 %v649, %v604
        %v651 = vrot.slane %v650, 4
        %v652 = vadd.f32 %v650, %v651
        %v653 = vrot.slane %v652, 2
        %v654 = vadd.f32 %v652, %v653
        %v655 = vrot.slane %v654, 1
        %v656 = vadd.f32 %v654, %v655
        %v657 = vadd.f32 %v605, %v606
        %v658 = vadd.f32 %v657, %v607
        %v659 = vadd.f32 %v658, %v608
        %v660 = vrot.slane %v659, 4
        %v661 = vadd.f32 %v659, %v660
        %v662 = vrot.slane %v661, 2
        %v663 = vadd.f32 %v661, %v662
        %v664 = vrot.slane %v663, 1
        %v665 = vadd.f32 %v663, %v664
        %v666 = vadd.f32 %v609, %v610
        %v667 = vadd.f32 %v666, %v611
        %v668 = vadd.f32 %v667, %v612
        %v669 = vrot.slane %v668, 4
        %v670 = vadd.f32 %v668, %v669
        %v671 = vrot.slane %v670, 2
        %v672 = vadd.f32 %v670, %v671
        %v673 = vrot.slane %v672, 1
        %v674 = vadd.f32 %v672, %v673
        %v675 = vadd.f32 %v613, %v614
        %v676 = vadd.f32 %v675, %v615
        %v677 = vadd.f32 %v676, %v616
        %v678 = vrot.slane %v677, 4
        %v679 = vadd.f32 %v677, %v678
        %v680 = vrot.slane %v679, 2
        %v681 = vadd.f32 %v679, %v680
        %v682 = vrot.slane %v681, 1
        %v683 = vadd.f32 %v681, %v682
        %v684 = vadd.f32 %v617, %v618
        %v685 = vadd.f32 %v684, %v619
        %v686 = vadd.f32 %v685, %v620
        %v687 = vrot.slane %v686, 4
        %v688 = vadd.f32 %v686, %v687
        %v689 = vrot.slane %v688, 2
        %v690 = vadd.f32 %v688, %v689
        %v691 = vrot.slane %v690, 1
        %v692 = vadd.f32 %v690, %v691
        %v693 = vsub.f32 0.0, %v629
        %v694 = vsub.f32 0.0, %v638
        %v695 = vsub.f32 0.0, %v647
        %v696 = vsub.f32 0.0, %v656
        %v697 = vsub.f32 0.0, %v665
        %v698 = vsub.f32 0.0, %v674
        %v699 = vsub.f32 0.0, %v683
        %v700 = vsub.f32 0.0, %v692
        %v701 = vmax.f32 %v693, %v697
        %v702 = vmax.f32 %v694, %v698
        %v703 = vmax.f32 %v695, %v699
        %v704 = vmax.f32 %v696, %v700
        %v705 = vmax.f32 %v701, %v702
        %v706 = vmax.f32 %v703, %v704
        %v707 = vmax.f32 %v705, %v706
        %v708 = vsub.f32 %v693, %v707
        %v709 = vsub.f32 %v694, %v707
        %v710 = vsub.f32 %v695, %v707
        %v711 = vsub.f32 %v696, %v707
        %v712 = vsub.f32 %v697, %v707
        %v713 = vsub.f32 %v698, %v707
        %v714 = vsub.f32 %v699, %v707
        %v715 = vsub.f32 %v700, %v707
        %v716 = vmul.f32 %v708, 1.442695
        %v717 = vpow.pop %v716
        %v718 = vmul.f32 %v709, 1.442695
        %v719 = vpow.pop %v718
        %v720 = vmul.f32 %v710, 1.442695
        %v721 = vpow.pop %v720
        %v722 = vmul.f32 %v711, 1.442695
        %v723 = vpow.pop %v722
        %v724 = vmul.f32 %v712, 1.442695
        %v725 = vpow.pop %v724
        %v726 = vmul.f32 %v713, 1.442695
        %v727 = vpow.pop %v726
        %v728 = vmul.f32 %v714, 1.442695
        %v729 = vpow.pop %v728
        %v730 = vmul.f32 %v715, 1.442695
        %v731 = vpow.pop %v730
        %v740 = vrot.slane %v719, 7
        %vm741 = vcmask 1041409
        %v742 = vsel %vm741, %v740, %v717
        %v743 = vrot.slane %v721, 6
        %vm744 = vcmask 1042434
        %v745 = vsel %vm744, %v743, %v742
        %v746 = vrot.slane %v723, 5
        %vm747 = vcmask 1043459
        %v748 = vsel %vm747, %v746, %v745
        %v749 = vrot.slane %v725, 4
        %vm750 = vcmask 1044484
        %v751 = vsel %vm750, %v749, %v748
        %v752 = vrot.slane %v727, 3
        %vm753 = vcmask 1045509
        %v754 = vsel %vm753, %v752, %v751
        %v755 = vrot.slane %v729, 2
        %vm756 = vcmask 1046534
        %v757 = vsel %vm756, %v755, %v754
        %v758 = vrot.slane %v731, 1
        %vm759 = vcmask 1047559
        %v760 = vsel %vm759, %v758, %v757
        %v762 = vrot.slane %v760, 4
        %v763 = vadd.f32 %v760, %v762
        %v764 = vrot.slane %v763, 2
        %v765 = vadd.f32 %v763, %v764
        %v766 = vrot.slane %v765, 1
        %v767 = vadd.f32 %v765, %v766
        %v768 = vlaneseq
        %v769 = vshrl.u32 %v768, 7
        %v770 = vsub.s32 0, %v769
        %v771 = vrot.slane %v767, %v770
        %v772 = vrcp.pop %v771
        %v773 = vmul.f32 %v717, %v772
        %v774 = vmul.f32 %v719, %v772
        %v775 = vmul.f32 %v721, %v772
        %v776 = vmul.f32 %v723, %v772
        %v777 = vmul.f32 %v725, %v772
        %v778 = vmul.f32 %v727, %v772
        %v779 = vmul.f32 %v729, %v772
        %v780 = vmul.f32 %v731, %v772
        %v781 = vsub.f32 %v494, %v498
        %v782 = vsub.f32 %v495, %v499
        %v783 = vsub.f32 %v496, %v500
        %v784 = vsub.f32 %v497, %v501
        %v785 = vmul.f32 %v781, %v781
        %v786 = vmul.f32 %v782, %v782
        %v787 = vmul.f32 %v783, %v783
        %v788 = vmul.f32 %v784, %v784
        %v789 = vadd.f32 %v785, %v786
        %v790 = vadd.f32 %v789, %v787
        %v791 = vadd.f32 %v790, %v788
        %v792 = vrot.slane %v791, 4
        %v793 = vadd.f32 %v791, %v792
        %v794 = vrot.slane %v793, 2
        %v795 = vadd.f32 %v793, %v794
        %v796 = vrot.slane %v795, 1
        %v797 = vadd.f32 %v795, %v796
        %v798 = vsub.f32 0.0, %v797
        %v799 = vsub.f32 %v502, %v498
        %v800 = vsub.f32 %v503, %v499
        %v801 = vsub.f32 %v504, %v500
        %v802 = vsub.f32 %v505, %v501
        %v803 = vsub.f32 %v506, %v498
        %v804 = vsub.f32 %v507, %v499
        %v805 = vsub.f32 %v508, %v500
        %v806 = vsub.f32 %v509, %v501
        %v807 = vsub.f32 %v510, %v498
        %v808 = vsub.f32 %v511, %v499
        %v809 = vsub.f32 %v512, %v500
        %v810 = vsub.f32 %v513, %v501
        %v811 = vsub.f32 %v514, %v498
        %v812 = vsub.f32 %v515, %v499
        %v813 = vsub.f32 %v516, %v500
        %v814 = vsub.f32 %v517, %v501
        %v815 = vsub.f32 %v518, %v498
        %v816 = vsub.f32 %v519, %v499
        %v817 = vsub.f32 %v520, %v500
        %v818 = vsub.f32 %v521, %v501
        %v819 = vsub.f32 %v522, %v498
        %v820 = vsub.f32 %v523, %v499
        %v821 = vsub.f32 %v524, %v500
        %v822 = vsub.f32 %v525, %v501
        %v823 = vsub.f32 %v526, %v498
        %v824 = vsub.f32 %v527, %v499
        %v825 = vsub.f32 %v528, %v500
        %v826 = vsub.f32 %v529, %v501
        %v827 = vsub.f32 %v530, %v498
        %v828 = vsub.f32 %v531, %v499
        %v829 = vsub.f32 %v532, %v500
        %v830 = vsub.f32 %v533, %v501
        %v831 = vmul.f32 %v799, %v799
        %v832 = vmul.f32 %v800, %v800
        %v833 = vmul.f32 %v801, %v801
        %v834 = vmul.f32 %v802, %v802
        %v835 = vmul.f32 %v803, %v803
        %v836 = vmul.f32 %v804, %v804
        %v837 = vmul.f32 %v805, %v805
        %v838 = vmul.f32 %v806, %v806
        %v839 = vmul.f32 %v807, %v807
        %v840 = vmul.f32 %v808, %v808
        %v841 = vmul.f32 %v809, %v809
        %v842 = vmul.f32 %v810, %v810
        %v843 = vmul.f32 %v811, %v811
        %v844 = vmul.f32 %v812, %v812
        %v845 = vmul.f32 %v813, %v813
        %v846 = vmul.f32 %v814, %v814
        %v847 = vmul.f32 %v815, %v815
        %v848 = vmul.f32 %v816, %v816
        %v849 = vmul.f32 %v817, %v817
        %v850 = vmul.f32 %v818, %v818
        %v851 = vmul.f32 %v819, %v819
        %v852 = vmul.f32 %v820, %v820
        %v853 = vmul.f32 %v821, %v821
        %v854 = vmul.f32 %v822, %v822
        %v855 = vmul.f32 %v823, %v823
        %v856 = vmul.f32 %v824, %v824
        %v857 = vmul.f32 %v825, %v825
        %v858 = vmul.f32 %v826, %v826
        %v859 = vmul.f32 %v827, %v827
        %v860 = vmul.f32 %v828, %v828
        %v861 = vmul.f32 %v829, %v829
        %v862 = vmul.f32 %v830, %v830
        %v863 = vadd.f32 %v831, %v832
        %v864 = vadd.f32 %v863, %v833
        %v865 = vadd.f32 %v864, %v834
        %v866 = vrot.slane %v865, 4
        %v867 = vadd.f32 %v865, %v866
        %v868 = vrot.slane %v867, 2
        %v869 = vadd.f32 %v867, %v868
        %v870 = vrot.slane %v869, 1
        %v871 = vadd.f32 %v869, %v870
        %v872 = vadd.f32 %v835, %v836
        %v873 = vadd.f32 %v872, %v837
        %v874 = vadd.f32 %v873, %v838
        %v875 = vrot.slane %v874, 4
        %v876 = vadd.f32 %v874, %v875
        %v877 = vrot.slane %v876, 2
        %v878 = vadd.f32 %v876, %v877
        %v879 = vrot.slane %v878, 1
        %v880 = vadd.f32 %v878, %v879
        %v881 = vadd.f32 %v839, %v840
        %v882 = vadd.f32 %v881, %v841
        %v883 = vadd.f32 %v882, %v842
        %v884 = vrot.slane %v883, 4
        %v885 = vadd.f32 %v883, %v884
        %v886 = vrot.slane %v885, 2
        %v887 = vadd.f32 %v885, %v886
        %v888 = vrot.slane %v887, 1
        %v889 = vadd.f32 %v887, %v888
        %v890 = vadd.f32 %v843, %v844
        %v891 = vadd.f32 %v890, %v845
        %v892 = vadd.f32 %v891, %v846
        %v893 = vrot.slane %v892, 4
        %v894 = vadd.f32 %v892, %v893
        %v895 = vrot.slane %v894, 2
        %v896 = vadd.f32 %v894, %v895
        %v897 = vrot.slane %v896, 1
        %v898 = vadd.f32 %v896, %v897
        %v899 = vadd.f32 %v847, %v848
        %v900 = vadd.f32 %v899, %v849
        %v901 = vadd.f32 %v900, %v850
        %v902 = vrot.slane %v901, 4
        %v903 = vadd.f32 %v901, %v902
        %v904 = vrot.slane %v903, 2
        %v905 = vadd.f32 %v903, %v904
        %v906 = vrot.slane %v905, 1
        %v907 = vadd.f32 %v905, %v906
        %v908 = vadd.f32 %v851, %v852
        %v909 = vadd.f32 %v908, %v853
        %v910 = vadd.f32 %v909, %v854
        %v911 = vrot.slane %v910, 4
        %v912 = vadd.f32 %v910, %v911
        %v913 = vrot.slane %v912, 2
        %v914 = vadd.f32 %v912, %v913
        %v915 = vrot.slane %v914, 1
        %v916 = vadd.f32 %v914, %v915
        %v917 = vadd.f32 %v855, %v856
        %v918 = vadd.f32 %v917, %v857
        %v919 = vadd.f32 %v918, %v858
        %v920 = vrot.slane %v919, 4
        %v921 = vadd.f32 %v919, %v920
        %v922 = vrot.slane %v921, 2
        %v923 = vadd.f32 %v921, %v922
        %v924 = vrot.slane %v923, 1
        %v925 = vadd.f32 %v923, %v924
        %v926 = vadd.f32 %v859, %v860
        %v927 = vadd.f32 %v926, %v861
        %v928 = vadd.f32 %v927, %v862
        %v929 = vrot.slane %v928, 4
        %v930 = vadd.f32 %v928, %v929
        %v931 = vrot.slane %v930, 2
        %v932 = vadd.f32 %v930, %v931
        %v933 = vrot.slane %v932, 1
        %v934 = vadd.f32 %v932, %v933
        %v935 = vsub.f32 0.0, %v871
        %v936 = vsub.f32 0.0, %v880
        %v937 = vsub.f32 0.0, %v889
        %v938 = vsub.f32 0.0, %v898
        %v939 = vsub.f32 0.0, %v907
        %v940 = vsub.f32 0.0, %v916
        %v941 = vsub.f32 0.0, %v925
        %v942 = vsub.f32 0.0, %v934
        %v944 = vlaneseq
        %v945 = vshrl.u32 %v944, 7
        %v946 = vsub.s32 0, %v945
        %v947 = vrot.slane %v554, %v946
        %v949 = vmul.f32 %v947, %v555
        %v950 = vmul.f32 %v949, 1.442695
        %v951 = vpow.pop %v950
        %v953 = vrot.slane %v951, 1
        %v954 = vrot.slane %v951, 2
        %v955 = vrot.slane %v951, 3
        %v956 = vrot.slane %v951, 4
        %v957 = vrot.slane %v951, 5
        %v958 = vrot.slane %v951, 6
        %v959 = vrot.slane %v951, 7
        %v968 = vmul.f32 %v773, %v951
        %v969 = vmul.f32 %v774, %v953
        %v970 = vmul.f32 %v775, %v954
        %v971 = vmul.f32 %v776, %v955
        %v972 = vmul.f32 %v777, %v956
        %v973 = vmul.f32 %v778, %v957
        %v974 = vmul.f32 %v779, %v958
        %v975 = vmul.f32 %v780, %v959
        %v977 = vrot.slane %v556, 1
        %v978 = vrot.slane %v556, 2
        %v979 = vrot.slane %v556, 3
        %v980 = vrot.slane %v556, 4
        %v981 = vrot.slane %v556, 5
        %v982 = vrot.slane %v556, 6
        %v983 = vrot.slane %v556, 7
        %v992 = vmul.f32 %v968, %v556
        %v993 = vmul.f32 %v969, %v977
        %v994 = vmul.f32 %v970, %v978
        %v995 = vmul.f32 %v971, %v979
        %v996 = vmul.f32 %v972, %v980
        %v997 = vmul.f32 %v973, %v981
        %v998 = vmul.f32 %v974, %v982
        %v999 = vmul.f32 %v975, %v983
        %v1000 = vmul.f32 %v992, %v935
        %v1001 = vmul.f32 %v993, %v936
        %v1002 = vmul.f32 %v994, %v937
        %v1003 = vmul.f32 %v995, %v938
        %v1004 = vmul.f32 %v996, %v939
        %v1005 = vmul.f32 %v997, %v940
        %v1006 = vmul.f32 %v998, %v941
        %v1007 = vmul.f32 %v999, %v942
        %v1016 = vrot.slane %v1001, 7
        %v1017 = vsel %vm741, %v1016, %v1000
        %v1018 = vrot.slane %v1002, 6
        %v1019 = vsel %vm744, %v1018, %v1017
        %v1020 = vrot.slane %v1003, 5
        %v1021 = vsel %vm747, %v1020, %v1019
        %v1022 = vrot.slane %v1004, 4
        %v1023 = vsel %vm750, %v1022, %v1021
        %v1024 = vrot.slane %v1005, 3
        %v1025 = vsel %vm753, %v1024, %v1023
        %v1026 = vrot.slane %v1006, 2
        %v1027 = vsel %vm756, %v1026, %v1025
        %v1028 = vrot.slane %v1007, 1
        %v1029 = vsel %vm759, %v1028, %v1027
        %v1031 = vrot.slane %v1029, 4
        %v1032 = vadd.f32 %v1029, %v1031
        %v1033 = vrot.slane %v1032, 2
        %v1034 = vadd.f32 %v1032, %v1033
        %v1035 = vrot.slane %v1034, 1
        %v1036 = vadd.f32 %v1034, %v1035
        %v1037 = vadd.f32 %v798, %v1036
        %v1038 = vsub.f32 %v494, %v534
        %v1039 = vsub.f32 %v495, %v535
        %v1040 = vsub.f32 %v496, %v536
        %v1041 = vsub.f32 %v497, %v537
        %v1042 = vsub.f32 %v494, %v538
        %v1043 = vsub.f32 %v495, %v539
        %v1044 = vsub.f32 %v496, %v540
        %v1045 = vsub.f32 %v497, %v541
        %v1046 = vsub.f32 %v494, %v542
        %v1047 = vsub.f32 %v495, %v543
        %v1048 = vsub.f32 %v496, %v544
        %v1049 = vsub.f32 %v497, %v545
        %v1050 = vsub.f32 %v494, %v546
        %v1051 = vsub.f32 %v495, %v547
        %v1052 = vsub.f32 %v496, %v548
        %v1053 = vsub.f32 %v497, %v549
        %v1054 = vsub.f32 %v494, %v550
        %v1055 = vsub.f32 %v495, %v551
        %v1056 = vsub.f32 %v496, %v552
        %v1057 = vsub.f32 %v497, %v553
        %v1058 = vmul.f32 %v1038, %v1038
        %v1059 = vmul.f32 %v1039, %v1039
        %v1060 = vmul.f32 %v1040, %v1040
        %v1061 = vmul.f32 %v1041, %v1041
        %v1062 = vmul.f32 %v1042, %v1042
        %v1063 = vmul.f32 %v1043, %v1043
        %v1064 = vmul.f32 %v1044, %v1044
        %v1065 = vmul.f32 %v1045, %v1045
        %v1066 = vmul.f32 %v1046, %v1046
        %v1067 = vmul.f32 %v1047, %v1047
        %v1068 = vmul.f32 %v1048, %v1048
        %v1069 = vmul.f32 %v1049, %v1049
        %v1070 = vmul.f32 %v1050, %v1050
        %v1071 = vmul.f32 %v1051, %v1051
        %v1072 = vmul.f32 %v1052, %v1052
        %v1073 = vmul.f32 %v1053, %v1053
        %v1074 = vmul.f32 %v1054, %v1054
        %v1075 = vmul.f32 %v1055, %v1055
        %v1076 = vmul.f32 %v1056, %v1056
        %v1077 = vmul.f32 %v1057, %v1057
        %v1078 = vadd.f32 %v1058, %v1059
        %v1079 = vadd.f32 %v1078, %v1060
        %v1080 = vadd.f32 %v1079, %v1061
        %v1081 = vrot.slane %v1080, 4
        %v1082 = vadd.f32 %v1080, %v1081
        %v1083 = vrot.slane %v1082, 2
        %v1084 = vadd.f32 %v1082, %v1083
        %v1085 = vrot.slane %v1084, 1
        %v1086 = vadd.f32 %v1084, %v1085
        %v1087 = vadd.f32 %v1062, %v1063
        %v1088 = vadd.f32 %v1087, %v1064
        %v1089 = vadd.f32 %v1088, %v1065
        %v1090 = vrot.slane %v1089, 4
        %v1091 = vadd.f32 %v1089, %v1090
        %v1092 = vrot.slane %v1091, 2
        %v1093 = vadd.f32 %v1091, %v1092
        %v1094 = vrot.slane %v1093, 1
        %v1095 = vadd.f32 %v1093, %v1094
        %v1096 = vadd.f32 %v1066, %v1067
        %v1097 = vadd.f32 %v1096, %v1068
        %v1098 = vadd.f32 %v1097, %v1069
        %v1099 = vrot.slane %v1098, 4
        %v1100 = vadd.f32 %v1098, %v1099
        %v1101 = vrot.slane %v1100, 2
        %v1102 = vadd.f32 %v1100, %v1101
        %v1103 = vrot.slane %v1102, 1
        %v1104 = vadd.f32 %v1102, %v1103
        %v1105 = vadd.f32 %v1070, %v1071
        %v1106 = vadd.f32 %v1105, %v1072
        %v1107 = vadd.f32 %v1106, %v1073
        %v1108 = vrot.slane %v1107, 4
        %v1109 = vadd.f32 %v1107, %v1108
        %v1110 = vrot.slane %v1109, 2
        %v1111 = vadd.f32 %v1109, %v1110
        %v1112 = vrot.slane %v1111, 1
        %v1113 = vadd.f32 %v1111, %v1112
        %v1114 = vadd.f32 %v1074, %v1075
        %v1115 = vadd.f32 %v1114, %v1076
        %v1116 = vadd.f32 %v1115, %v1077
        %v1117 = vrot.slane %v1116, 4
        %v1118 = vadd.f32 %v1116, %v1117
        %v1119 = vrot.slane %v1118, 2
        %v1120 = vadd.f32 %v1118, %v1119
        %v1121 = vrot.slane %v1120, 1
        %v1122 = vadd.f32 %v1120, %v1121
        %v1123 = vsub.f32 0.0, %v1086
        %v1124 = vsub.f32 0.0, %v1095
        %v1125 = vsub.f32 0.0, %v1104
        %v1126 = vsub.f32 0.0, %v1113
        %v1127 = vsub.f32 0.0, %v1122
        %v1128 = vmul.f32 %v502, %v502
        %v1129 = vmul.f32 %v503, %v503
        %v1130 = vmul.f32 %v504, %v504
        %v1131 = vmul.f32 %v505, %v505
        %v1132 = vmul.f32 %v506, %v506
        %v1133 = vmul.f32 %v507, %v507
        %v1134 = vmul.f32 %v508, %v508
        %v1135 = vmul.f32 %v509, %v509
        %v1136 = vmul.f32 %v510, %v510
        %v1137 = vmul.f32 %v511, %v511
        %v1138 = vmul.f32 %v512, %v512
        %v1139 = vmul.f32 %v513, %v513
        %v1140 = vmul.f32 %v514, %v514
        %v1141 = vmul.f32 %v515, %v515
        %v1142 = vmul.f32 %v516, %v516
        %v1143 = vmul.f32 %v517, %v517
        %v1144 = vmul.f32 %v518, %v518
        %v1145 = vmul.f32 %v519, %v519
        %v1146 = vmul.f32 %v520, %v520
        %v1147 = vmul.f32 %v521, %v521
        %v1148 = vmul.f32 %v522, %v522
        %v1149 = vmul.f32 %v523, %v523
        %v1150 = vmul.f32 %v524, %v524
        %v1151 = vmul.f32 %v525, %v525
        %v1152 = vmul.f32 %v526, %v526
        %v1153 = vmul.f32 %v527, %v527
        %v1154 = vmul.f32 %v528, %v528
        %v1155 = vmul.f32 %v529, %v529
        %v1156 = vmul.f32 %v530, %v530
        %v1157 = vmul.f32 %v531, %v531
        %v1158 = vmul.f32 %v532, %v532
        %v1159 = vmul.f32 %v533, %v533
        %v1160 = vadd.f32 %v1128, %v1129
        %v1161 = vadd.f32 %v1160, %v1130
        %v1162 = vadd.f32 %v1161, %v1131
        %v1163 = vrot.slane %v1162, 4
        %v1164 = vadd.f32 %v1162, %v1163
        %v1165 = vrot.slane %v1164, 2
        %v1166 = vadd.f32 %v1164, %v1165
        %v1167 = vrot.slane %v1166, 1
        %v1168 = vadd.f32 %v1166, %v1167
        %v1169 = vadd.f32 %v1132, %v1133
        %v1170 = vadd.f32 %v1169, %v1134
        %v1171 = vadd.f32 %v1170, %v1135
        %v1172 = vrot.slane %v1171, 4
        %v1173 = vadd.f32 %v1171, %v1172
        %v1174 = vrot.slane %v1173, 2
        %v1175 = vadd.f32 %v1173, %v1174
        %v1176 = vrot.slane %v1175, 1
        %v1177 = vadd.f32 %v1175, %v1176
        %v1178 = vadd.f32 %v1136, %v1137
        %v1179 = vadd.f32 %v1178, %v1138
        %v1180 = vadd.f32 %v1179, %v1139
        %v1181 = vrot.slane %v1180, 4
        %v1182 = vadd.f32 %v1180, %v1181
        %v1183 = vrot.slane %v1182, 2
        %v1184 = vadd.f32 %v1182, %v1183
        %v1185 = vrot.slane %v1184, 1
        %v1186 = vadd.f32 %v1184, %v1185
        %v1187 = vadd.f32 %v1140, %v1141
        %v1188 = vadd.f32 %v1187, %v1142
        %v1189 = vadd.f32 %v1188, %v1143
        %v1190 = vrot.slane %v1189, 4
        %v1191 = vadd.f32 %v1189, %v1190
        %v1192 = vrot.slane %v1191, 2
        %v1193 = vadd.f32 %v1191, %v1192
        %v1194 = vrot.slane %v1193, 1
        %v1195 = vadd.f32 %v1193, %v1194
        %v1196 = vadd.f32 %v1144, %v1145
        %v1197 = vadd.f32 %v1196, %v1146
        %v1198 = vadd.f32 %v1197, %v1147
        %v1199 = vrot.slane %v1198, 4
        %v1200 = vadd.f32 %v1198, %v1199
        %v1201 = vrot.slane %v1200, 2
        %v1202 = vadd.f32 %v1200, %v1201
        %v1203 = vrot.slane %v1202, 1
        %v1204 = vadd.f32 %v1202, %v1203
        %v1205 = vadd.f32 %v1148, %v1149
        %v1206 = vadd.f32 %v1205, %v1150
        %v1207 = vadd.f32 %v1206, %v1151
        %v1208 = vrot.slane %v1207, 4
        %v1209 = vadd.f32 %v1207, %v1208
        %v1210 = vrot.slane %v1209, 2
        %v1211 = vadd.f32 %v1209, %v1210
        %v1212 = vrot.slane %v1211, 1
        %v1213 = vadd.f32 %v1211, %v1212
        %v1214 = vadd.f32 %v1152, %v1153
        %v1215 = vadd.f32 %v1214, %v1154
        %v1216 = vadd.f32 %v1215, %v1155
        %v1217 = vrot.slane %v1216, 4
        %v1218 = vadd.f32 %v1216, %v1217
        %v1219 = vrot.slane %v1218, 2
        %v1220 = vadd.f32 %v1218, %v1219
        %v1221 = vrot.slane %v1220, 1
        %v1222 = vadd.f32 %v1220, %v1221
        %v1223 = vadd.f32 %v1156, %v1157
        %v1224 = vadd.f32 %v1223, %v1158
        %v1225 = vadd.f32 %v1224, %v1159
        %v1226 = vrot.slane %v1225, 4
        %v1227 = vadd.f32 %v1225, %v1226
        %v1228 = vrot.slane %v1227, 2
        %v1229 = vadd.f32 %v1227, %v1228
        %v1230 = vrot.slane %v1229, 1
        %v1231 = vadd.f32 %v1229, %v1230
        %v1232 = vmul.f32 %v534, %v534
        %v1233 = vmul.f32 %v535, %v535
        %v1234 = vmul.f32 %v536, %v536
        %v1235 = vmul.f32 %v537, %v537
        %v1236 = vmul.f32 %v538, %v538
        %v1237 = vmul.f32 %v539, %v539
        %v1238 = vmul.f32 %v540, %v540
        %v1239 = vmul.f32 %v541, %v541
        %v1240 = vmul.f32 %v542, %v542
        %v1241 = vmul.f32 %v543, %v543
        %v1242 = vmul.f32 %v544, %v544
        %v1243 = vmul.f32 %v545, %v545
        %v1244 = vmul.f32 %v546, %v546
        %v1245 = vmul.f32 %v547, %v547
        %v1246 = vmul.f32 %v548, %v548
        %v1247 = vmul.f32 %v549, %v549
        %v1248 = vmul.f32 %v550, %v550
        %v1249 = vmul.f32 %v551, %v551
        %v1250 = vmul.f32 %v552, %v552
        %v1251 = vmul.f32 %v553, %v553
        %v1252 = vadd.f32 %v1232, %v1233
        %v1253 = vadd.f32 %v1252, %v1234
        %v1254 = vadd.f32 %v1253, %v1235
        %v1255 = vrot.slane %v1254, 4
        %v1256 = vadd.f32 %v1254, %v1255
        %v1257 = vrot.slane %v1256, 2
        %v1258 = vadd.f32 %v1256, %v1257
        %v1259 = vrot.slane %v1258, 1
        %v1260 = vadd.f32 %v1258, %v1259
        %v1261 = vadd.f32 %v1236, %v1237
        %v1262 = vadd.f32 %v1261, %v1238
        %v1263 = vadd.f32 %v1262, %v1239
        %v1264 = vrot.slane %v1263, 4
        %v1265 = vadd.f32 %v1263, %v1264
        %v1266 = vrot.slane %v1265, 2
        %v1267 = vadd.f32 %v1265, %v1266
        %v1268 = vrot.slane %v1267, 1
        %v1269 = vadd.f32 %v1267, %v1268
        %v1270 = vadd.f32 %v1240, %v1241
        %v1271 = vadd.f32 %v1270, %v1242
        %v1272 = vadd.f32 %v1271, %v1243
        %v1273 = vrot.slane %v1272, 4
        %v1274 = vadd.f32 %v1272, %v1273
        %v1275 = vrot.slane %v1274, 2
        %v1276 = vadd.f32 %v1274, %v1275
        %v1277 = vrot.slane %v1276, 1
        %v1278 = vadd.f32 %v1276, %v1277
        %v1279 = vadd.f32 %v1244, %v1245
        %v1280 = vadd.f32 %v1279, %v1246
        %v1281 = vadd.f32 %v1280, %v1247
        %v1282 = vrot.slane %v1281, 4
        %v1283 = vadd.f32 %v1281, %v1282
        %v1284 = vrot.slane %v1283, 2
        %v1285 = vadd.f32 %v1283, %v1284
        %v1286 = vrot.slane %v1285, 1
        %v1287 = vadd.f32 %v1285, %v1286
        %v1288 = vadd.f32 %v1248, %v1249
        %v1289 = vadd.f32 %v1288, %v1250
        %v1290 = vadd.f32 %v1289, %v1251
        %v1291 = vrot.slane %v1290, 4
        %v1292 = vadd.f32 %v1290, %v1291
        %v1293 = vrot.slane %v1292, 2
        %v1294 = vadd.f32 %v1292, %v1293
        %v1295 = vrot.slane %v1294, 1
        %v1296 = vadd.f32 %v1294, %v1295
        %v1305 = vrot.slane %v993, 7
        %v1306 = vsel %vm741, %v1305, %v992
        %v1307 = vrot.slane %v994, 6
        %v1308 = vsel %vm744, %v1307, %v1306
        %v1309 = vrot.slane %v995, 5
        %v1310 = vsel %vm747, %v1309, %v1308
        %v1311 = vrot.slane %v996, 4
        %v1312 = vsel %vm750, %v1311, %v1310
        %v1313 = vrot.slane %v997, 3
        %v1314 = vsel %vm753, %v1313, %v1312
        %v1315 = vrot.slane %v998, 2
        %v1316 = vsel %vm756, %v1315, %v1314
        %v1317 = vrot.slane %v999, 1
        %v1318 = vsel %vm759, %v1317, %v1316
        %v1320 = vrot.slane %v1318, 4
        %v1321 = vadd.f32 %v1318, %v1320
        %v1322 = vrot.slane %v1321, 2
        %v1323 = vadd.f32 %v1321, %v1322
        %v1324 = vrot.slane %v1323, 1
        %v1325 = vadd.f32 %v1323, %v1324
        %v1326 = vmul.f32 %v992, %v1168
        %v1327 = vmul.f32 %v993, %v1177
        %v1328 = vmul.f32 %v994, %v1186
        %v1329 = vmul.f32 %v995, %v1195
        %v1330 = vmul.f32 %v996, %v1204
        %v1331 = vmul.f32 %v997, %v1213
        %v1332 = vmul.f32 %v998, %v1222
        %v1333 = vmul.f32 %v999, %v1231
        %v1342 = vrot.slane %v1327, 7
        %v1343 = vsel %vm741, %v1342, %v1326
        %v1344 = vrot.slane %v1328, 6
        %v1345 = vsel %vm744, %v1344, %v1343
        %v1346 = vrot.slane %v1329, 5
        %v1347 = vsel %vm747, %v1346, %v1345
        %v1348 = vrot.slane %v1330, 4
        %v1349 = vsel %vm750, %v1348, %v1347
        %v1350 = vrot.slane %v1331, 3
        %v1351 = vsel %vm753, %v1350, %v1349
        %v1352 = vrot.slane %v1332, 2
        %v1353 = vsel %vm756, %v1352, %v1351
        %v1354 = vrot.slane %v1333, 1
        %v1355 = vsel %vm759, %v1354, %v1353
        %v1357 = vrot.slane %v1355, 4
        %v1358 = vadd.f32 %v1355, %v1357
        %v1359 = vrot.slane %v1358, 2
        %v1360 = vadd.f32 %v1358, %v1359
        %v1361 = vrot.slane %v1360, 1
        %v1362 = vadd.f32 %v1360, %v1361
        %v1363 = vlaneseq
        %v1364 = vshrl.u32 %v1363, 7
        %v1365 = vsub.s32 0, %v1364
        %v1366 = vrot.slane %v992, %v1365
        %v1367 = vlaneseq
        %v1368 = vshrl.u32 %v1367, 7
        %v1369 = vsub.s32 0, %v1368
        %v1370 = vrot.slane %v993, %v1369
        %v1371 = vlaneseq
        %v1372 = vshrl.u32 %v1371, 7
        %v1373 = vsub.s32 0, %v1372
        %v1374 = vrot.slane %v994, %v1373
        %v1375 = vlaneseq
        %v1376 = vshrl.u32 %v1375, 7
        %v1377 = vsub.s32 0, %v1376
        %v1378 = vrot.slane %v995, %v1377
        %v1379 = vlaneseq
        %v1380 = vshrl.u32 %v1379, 7
        %v1381 = vsub.s32 0, %v1380
        %v1382 = vrot.slane %v996, %v1381
        %v1383 = vlaneseq
        %v1384 = vshrl.u32 %v1383, 7
        %v1385 = vsub.s32 0, %v1384
        %v1386 = vrot.slane %v997, %v1385
        %v1387 = vlaneseq
        %v1388 = vshrl.u32 %v1387, 7
        %v1389 = vsub.s32 0, %v1388
        %v1390 = vrot.slane %v998, %v1389
        %v1391 = vlaneseq
        %v1392 = vshrl.u32 %v1391, 7
        %v1393 = vsub.s32 0, %v1392
        %v1394 = vrot.slane %v999, %v1393
        %v1395 = vmul.f32 %v1366, %v502
        %v1396 = vmul.f32 %v1366, %v503
        %v1397 = vmul.f32 %v1366, %v504
        %v1398 = vmul.f32 %v1366, %v505
        %v1399 = vmul.f32 %v1370, %v506
        %v1400 = vmul.f32 %v1370, %v507
        %v1401 = vmul.f32 %v1370, %v508
        %v1402 = vmul.f32 %v1370, %v509
        %v1403 = vmul.f32 %v1374, %v510
        %v1404 = vmul.f32 %v1374, %v511
        %v1405 = vmul.f32 %v1374, %v512
        %v1406 = vmul.f32 %v1374, %v513
        %v1407 = vmul.f32 %v1378, %v514
        %v1408 = vmul.f32 %v1378, %v515
        %v1409 = vmul.f32 %v1378, %v516
        %v1410 = vmul.f32 %v1378, %v517
        %v1411 = vmul.f32 %v1382, %v518
        %v1412 = vmul.f32 %v1382, %v519
        %v1413 = vmul.f32 %v1382, %v520
        %v1414 = vmul.f32 %v1382, %v521
        %v1415 = vmul.f32 %v1386, %v522
        %v1416 = vmul.f32 %v1386, %v523
        %v1417 = vmul.f32 %v1386, %v524
        %v1418 = vmul.f32 %v1386, %v525
        %v1419 = vmul.f32 %v1390, %v526
        %v1420 = vmul.f32 %v1390, %v527
        %v1421 = vmul.f32 %v1390, %v528
        %v1422 = vmul.f32 %v1390, %v529
        %v1423 = vmul.f32 %v1394, %v530
        %v1424 = vmul.f32 %v1394, %v531
        %v1425 = vmul.f32 %v1394, %v532
        %v1426 = vmul.f32 %v1394, %v533
        %v1427 = vadd.f32 %v1395, %v1399
        %v1428 = vadd.f32 %v1427, %v1403
        %v1429 = vadd.f32 %v1428, %v1407
        %v1430 = vadd.f32 %v1429, %v1411
        %v1431 = vadd.f32 %v1430, %v1415
        %v1432 = vadd.f32 %v1431, %v1419
        %v1433 = vadd.f32 %v1432, %v1423
        %v1434 = vadd.f32 %v1396, %v1400
        %v1435 = vadd.f32 %v1434, %v1404
        %v1436 = vadd.f32 %v1435, %v1408
        %v1437 = vadd.f32 %v1436, %v1412
        %v1438 = vadd.f32 %v1437, %v1416
        %v1439 = vadd.f32 %v1438, %v1420
        %v1440 = vadd.f32 %v1439, %v1424
        %v1441 = vadd.f32 %v1397, %v1401
        %v1442 = vadd.f32 %v1441, %v1405
        %v1443 = vadd.f32 %v1442, %v1409
        %v1444 = vadd.f32 %v1443, %v1413
        %v1445 = vadd.f32 %v1444, %v1417
        %v1446 = vadd.f32 %v1445, %v1421
        %v1447 = vadd.f32 %v1446, %v1425
        %v1448 = vadd.f32 %v1398, %v1402
        %v1449 = vadd.f32 %v1448, %v1406
        %v1450 = vadd.f32 %v1449, %v1410
        %v1451 = vadd.f32 %v1450, %v1414
        %v1452 = vadd.f32 %v1451, %v1418
        %v1453 = vadd.f32 %v1452, %v1422
        %v1454 = vadd.f32 %v1453, %v1426
        %v1455 = vmul.f32 %v1433, %v534
        %v1456 = vmul.f32 %v1440, %v535
        %v1457 = vmul.f32 %v1447, %v536
        %v1458 = vmul.f32 %v1454, %v537
        %v1459 = vmul.f32 %v1433, %v538
        %v1460 = vmul.f32 %v1440, %v539
        %v1461 = vmul.f32 %v1447, %v540
        %v1462 = vmul.f32 %v1454, %v541
        %v1463 = vmul.f32 %v1433, %v542
        %v1464 = vmul.f32 %v1440, %v543
        %v1465 = vmul.f32 %v1447, %v544
        %v1466 = vmul.f32 %v1454, %v545
        %v1467 = vmul.f32 %v1433, %v546
        %v1468 = vmul.f32 %v1440, %v547
        %v1469 = vmul.f32 %v1447, %v548
        %v1470 = vmul.f32 %v1454, %v549
        %v1471 = vmul.f32 %v1433, %v550
        %v1472 = vmul.f32 %v1440, %v551
        %v1473 = vmul.f32 %v1447, %v552
        %v1474 = vmul.f32 %v1454, %v553
        %v1475 = vadd.f32 %v1455, %v1456
        %v1476 = vadd.f32 %v1475, %v1457
        %v1477 = vadd.f32 %v1476, %v1458
        %v1478 = vrot.slane %v1477, 4
        %v1479 = vadd.f32 %v1477, %v1478
        %v1480 = vrot.slane %v1479, 2
        %v1481 = vadd.f32 %v1479, %v1480
        %v1482 = vrot.slane %v1481, 1
        %v1483 = vadd.f32 %v1481, %v1482
        %v1484 = vadd.f32 %v1459, %v1460
        %v1485 = vadd.f32 %v1484, %v1461
        %v1486 = vadd.f32 %v1485, %v1462
        %v1487 = vrot.slane %v1486, 4
        %v1488 = vadd.f32 %v1486, %v1487
        %v1489 = vrot.slane %v1488, 2
        %v1490 = vadd.f32 %v1488, %v1489
        %v1491 = vrot.slane %v1490, 1
        %v1492 = vadd.f32 %v1490, %v1491
        %v1493 = vadd.f32 %v1463, %v1464
        %v1494 = vadd.f32 %v1493, %v1465
        %v1495 = vadd.f32 %v1494, %v1466
        %v1496 = vrot.slane %v1495, 4
        %v1497 = vadd.f32 %v1495, %v1496
        %v1498 = vrot.slane %v1497, 2
        %v1499 = vadd.f32 %v1497, %v1498
        %v1500 = vrot.slane %v1499, 1
        %v1501 = vadd.f32 %v1499, %v1500
        %v1502 = vadd.f32 %v1467, %v1468
        %v1503 = vadd.f32 %v1502, %v1469
        %v1504 = vadd.f32 %v1503, %v1470
        %v1505 = vrot.slane %v1504, 4
        %v1506 = vadd.f32 %v1504, %v1505
        %v1507 = vrot.slane %v1506, 2
        %v1508 = vadd.f32 %v1506, %v1507
        %v1509 = vrot.slane %v1508, 1
        %v1510 = vadd.f32 %v1508, %v1509
        %v1511 = vadd.f32 %v1471, %v1472
        %v1512 = vadd.f32 %v1511, %v1473
        %v1513 = vadd.f32 %v1512, %v1474
        %v1514 = vrot.slane %v1513, 4
        %v1515 = vadd.f32 %v1513, %v1514
        %v1516 = vrot.slane %v1515, 2
        %v1517 = vadd.f32 %v1515, %v1516
        %v1518 = vrot.slane %v1517, 1
        %v1519 = vadd.f32 %v1517, %v1518
        %v1520 = vlaneseq
        %v1521 = vshrl.u32 %v1520, 7
        %v1522 = vsub.s32 0, %v1521
        %v1523 = vrot.slane %v1362, %v1522
        %v1524 = vsub.f32 %v1123, %v1523
        %v1525 = vsub.f32 %v1124, %v1523
        %v1526 = vsub.f32 %v1125, %v1523
        %v1527 = vsub.f32 %v1126, %v1523
        %v1528 = vsub.f32 %v1127, %v1523
        %v1529 = vlaneseq
        %v1530 = vshrl.u32 %v1529, 7
        %v1531 = vsub.s32 0, %v1530
        %v1532 = vrot.slane %v1325, %v1531
        %v1538 = vsel %vm741, %v1269, %v1260
        %v1539 = vsel %vm744, %v1278, %v1538
        %v1540 = vsel %vm747, %v1287, %v1539
        %v1541 = vsel %vm750, %v1296, %v1540
        %v1543 = vmul.f32 %v1532, %v1541
        %v1545 = vrot.slane %v1543, 1
        %v1546 = vrot.slane %v1543, 2
        %v1547 = vrot.slane %v1543, 3
        %v1548 = vrot.slane %v1543, 4
        %v1554 = vsub.f32 %v1524, %v1543
        %v1555 = vsub.f32 %v1525, %v1545
        %v1556 = vsub.f32 %v1526, %v1546
        %v1557 = vsub.f32 %v1527, %v1547
        %v1558 = vsub.f32 %v1528, %v1548
        %v1559 = vmul.f32 %v1483, 2.0
        %v1560 = vmul.f32 %v1492, 2.0
        %v1561 = vmul.f32 %v1501, 2.0
        %v1562 = vmul.f32 %v1510, 2.0
        %v1563 = vmul.f32 %v1519, 2.0
        %v1564 = vadd.f32 %v1554, %v1559
        %v1565 = vadd.f32 %v1555, %v1560
        %v1566 = vadd.f32 %v1556, %v1561
        %v1567 = vadd.f32 %v1557, %v1562
        %v1568 = vadd.f32 %v1558, %v1563
        %v1569 = vsub.f32 0.0, %v1037
        %v1570 = vmul.f32 %v1569, 1.442695
        %v1571 = vpow.pop %v1570
        %v1572 = vadd.f32 %v1571, 1.0
        %v1573 = vrcp.pop %v1572
        %v1574 = vmul.f32 1.0, %v1573
        %v1575 = vadd.f32 %v1574, 1e-06
        %v1576 = vlog2.pop %v1575
        %v1577 = vmul.f32 %v1576, 0.6931472
        %v1578 = vsub.f32 0.0, %v1577
        %v1579 = vsub.f32 0.0, %v1564
        %v1580 = vsub.f32 0.0, %v1565
        %v1581 = vsub.f32 0.0, %v1566
        %v1582 = vsub.f32 0.0, %v1567
        %v1583 = vsub.f32 0.0, %v1568
        %v1584 = vsub.f32 0.0, %v1579
        %v1585 = vsub.f32 0.0, %v1580
        %v1586 = vsub.f32 0.0, %v1581
        %v1587 = vsub.f32 0.0, %v1582
        %v1588 = vsub.f32 0.0, %v1583
        %v1589 = vmul.f32 %v1584, 1.442695
        %v1590 = vpow.pop %v1589
        %v1591 = vmul.f32 %v1585, 1.442695
        %v1592 = vpow.pop %v1591
        %v1593 = vmul.f32 %v1586, 1.442695
        %v1594 = vpow.pop %v1593
        %v1595 = vmul.f32 %v1587, 1.442695
        %v1596 = vpow.pop %v1595
        %v1597 = vmul.f32 %v1588, 1.442695
        %v1598 = vpow.pop %v1597
        %v1599 = vadd.f32 %v1590, 1.0
        %v1600 = vadd.f32 %v1592, 1.0
        %v1601 = vadd.f32 %v1594, 1.0
        %v1602 = vadd.f32 %v1596, 1.0
        %v1603 = vadd.f32 %v1598, 1.0
        %v1604 = vrcp.pop %v1599
        %v1605 = vmul.f32 1.0, %v1604
        %v1606 = vrcp.pop %v1600
        %v1607 = vmul.f32 1.0, %v1606
        %v1608 = vrcp.pop %v1601
        %v1609 = vmul.f32 1.0, %v1608
        %v1610 = vrcp.pop %v1602
        %v1611 = vmul.f32 1.0, %v1610
        %v1612 = vrcp.pop %v1603
        %v1613 = vmul.f32 1.0, %v1612
        %v1614 = vadd.f32 %v1605, 1e-06
        %v1615 = vadd.f32 %v1607, 1e-06
        %v1616 = vadd.f32 %v1609, 1e-06
        %v1617 = vadd.f32 %v1611, 1e-06
        %v1618 = vadd.f32 %v1613, 1e-06
        %v1619 = vlog2.pop %v1614
        %v1620 = vmul.f32 %v1619, 0.6931472
        %v1621 = vlog2.pop %v1615
        %v1622 = vmul.f32 %v1621, 0.6931472
        %v1623 = vlog2.pop %v1616
        %v1624 = vmul.f32 %v1623, 0.6931472
        %v1625 = vlog2.pop %v1617
        %v1626 = vmul.f32 %v1625, 0.6931472
        %v1627 = vlog2.pop %v1618
        %v1628 = vmul.f32 %v1627, 0.6931472
        %v1634 = vrot.slane %v1622, 7
        %v1635 = vsel %vm741, %v1634, %v1620
        %v1636 = vrot.slane %v1624, 6
        %v1637 = vsel %vm744, %v1636, %v1635
        %v1638 = vrot.slane %v1626, 5
        %v1639 = vsel %vm747, %v1638, %v1637
        %v1640 = vrot.slane %v1628, 4
        %v1641 = vsel %vm750, %v1640, %v1639
        %vm1643 = vcmask 1044480
        %v1644 = vsel %vm1643, %v1641, 0.0
        %v1645 = vrot.slane %v1644, 4
        %v1646 = vadd.f32 %v1644, %v1645
        %v1647 = vrot.slane %v1646, 2
        %v1648 = vadd.f32 %v1646, %v1647
        %v1649 = vrot.slane %v1648, 1
        %v1650 = vadd.f32 %v1648, %v1649
        %v1651 = vsub.f32 %v1578, %v1650
        %1652 = vst [vmem:[%s490] sm:$0x1] %v1651
        %s1653 = sand.u32 %s223, 1
        %s1654 = scalar_lea.sflag [#allocation4], %s1653
        %s1655 = sand.u32 %s223, 1
        %s1656 = scalar_lea.vmem [#allocation13], %s1655
        // Predicated region
        $region73: #{tpu_custom_call.1} parent=47 // pred_check
          %p1657 = pneg %p233
        $region74: #{tpu_custom_call.1} parent=47 // pred_check_branch
          %1659 = sbr.rel (%p1657) target = $region76
        $region75: #{tpu_custom_call.1} parent=47 // pred_region
          %s1661 = ssub.s32 16, 16
          %1662 = vsyncadd %s1654, %s1661
          %s1663 = smul.addr %s33, 16
          %s1664 = scalar_lea.hbm %s7, %s1663
          %s1666 = sshll.u32 %s1656, 4
          %s1667 = int_to_ptr.vmem [resolvable:$true] %s1666
          %1669 = dma.vmem_to_hbm [thread:$0]  %s1667, 16, %s1664, %s1654
        $region76: #{tpu_custom_call.1} parent=47 // pred_fallthru
          _
      $region48: #{tpu_custom_call.1} parent=5 // pred_fallthru
        _
      %p1670 = scmp.le.s32.totalorder 2, %s28
      // Predicated region
      $region77: #{tpu_custom_call.1} parent=5 // pred_check
        %p1671 = pneg %p1670
      $region78: #{tpu_custom_call.1} parent=5 // pred_check_branch
        %1673 = sbr.rel (%p1671) target = $region80
      $region79: #{tpu_custom_call.1} parent=5 // pred_region
        %s1674 = ssub.s32 %s28, 2
        // Predicated region
        $region81: #{tpu_custom_call.1} parent=79 // pred_check
          %p1675 = pneg %p239
        $region82: #{tpu_custom_call.1} parent=79 // pred_check_branch
          %1677 = sbr.rel (%p1675) target = $region84
        $region83: #{tpu_custom_call.1} parent=79 // pred_region
          %s1678 = sand.u32 %s224, 1
          %s1679 = scalar_lea.sflag [#allocation4], %s1678
          %s1680 = sand.u32 %s224, 1
          %s1681 = scalar_lea.vmem [#allocation13], %s1680
          %1682 = dma.done %s1679, 16
        $region84: #{tpu_custom_call.1} parent=79 // pred_fallthru
          _
      $region80: #{tpu_custom_call.1} parent=5 // pred_fallthru
        _
    $region6: #{tpu_custom_call.1} parent=1 // loop_footer
      %s32 = sadd.s32 1, %s28
    $region7: #{tpu_custom_call.1} parent=1 // loop_footer_branch
      %27 = sbr.rel target = $region3
    $region8: #{tpu_custom_call.1} parent=1 // loop_exit
      _
    %1683 = vsyncpa [#allocation3], 1
    %s1684 = scalar_lea.sflag [#allocation3], 1
    %1685 = vsyncpa %s1684, 1
    %1686 = vsyncpa [#allocation6], 1
    %s1687 = scalar_lea.sflag [#allocation6], 1
    %1688 = vsyncpa %s1687, 1
    %1689 = vsyncpa [#allocation9], 1
    %s1690 = scalar_lea.sflag [#allocation9], 1
    %1691 = vsyncpa %s1690, 1
    %1692 = vsyncpa [#allocation12], 1
    %s1693 = scalar_lea.sflag [#allocation12], 1
    %1694 = vsyncpa %s1693, 1
    %1695 = vsyncpa [#allocation4], 1
    %s1696 = scalar_lea.sflag [#allocation4], 1
    %1697 = vsyncpa %s1696, 1

</llo_original>
